<compile_context>
chip_gen: v6e
topology: v6e:2x2x1
jax: 0.10.0
libtpu: 0.0.40
codegen_flags: <defaults>
</compile_context>

<pallas_src>
import functools

import jax
import jax.numpy as jnp
from jax import lax
from jax.experimental import pallas as pl
from jax.experimental.pallas import tpu as pltpu


NEG_SLOPE = 0.2  # LeakyReLU slope used by the reference GAT formulation.


def _gat_encoder_kernel(x_ref, bias_ref, w1_ref, a1_ref, w2_ref, a2_ref, out_ref,
                        *, num_heads, hidden_dim):
    f32 = jnp.float32
    bias = bias_ref[...]                       # [N, N] additive adjacency bias (0 / -1e30)
    n = bias.shape[0]
    ones = jnp.ones((n, 1), f32)

    # ---------- layer 1: multi-head GAT, concat heads, ELU ----------
    # bf16 x bf16 -> f32 accumulate on the MXU.
    h_all = jnp.dot(x_ref[...], w1_ref[...], preferred_element_type=f32)   # [N, nh*hid]
    # All heads' src/dst scores in one matmul against the packed block-diag matrix.
    s_all = jnp.dot(h_all, a1_ref[...], preferred_element_type=f32)        # [N, 2*nh]

    head_outs = []
    for hd in range(num_heads):                # static unroll (num_heads = 3)
        h = h_all[:, hd * hidden_dim:(hd + 1) * hidden_dim]                # [N, hid]
        s_src = s_all[:, hd:hd + 1]                                        # [N, 1]
        s_dst = s_all[:, num_heads + hd:num_heads + hd + 1]                # [N, 1]
        # Outer sum e[i,j] = s_src[i] + s_dst[j] via an MXU dot (no XLU transpose).
        u = jnp.concatenate([s_src, ones], axis=1)                         # [N, 2]
        v = jnp.concatenate([ones, s_dst], axis=1)                         # [N, 2]
        e = lax.dot_general(u, v, (((1,), (1,)), ((), ())),
                            preferred_element_type=f32)                    # [N, N]
        e = jnp.where(e > 0, e, NEG_SLOPE * e)                             # LeakyReLU
        e = e + bias                                                       # mask non-edges
        e = e - jnp.max(e, axis=-1, keepdims=True)                         # stable softmax
        p = jnp.exp(e)
        l = jnp.sum(p, axis=-1, keepdims=True)
        agg = jnp.dot(p, h, preferred_element_type=f32)                    # [N, hid]
        head_outs.append(agg / l)                                          # normalize small tile

    h1 = jnp.concatenate(head_outs, axis=-1)                               # [N, nh*hid]
    h1 = jnp.where(h1 > 0, h1, jnp.exp(h1) - 1.0)                          # ELU

    # ---------- layer 2: single-head GAT -> embeddings ----------
    h2 = jnp.dot(h1.astype(jnp.bfloat16), w2_ref[...],
                 preferred_element_type=f32)                               # [N, embed]
    s2 = jnp.dot(h2, a2_ref[...], preferred_element_type=f32)              # [N, 2]
    u2 = jnp.concatenate([s2[:, 0:1], ones], axis=1)
    v2 = jnp.concatenate([ones, s2[:, 1:2]], axis=1)
    e2 = lax.dot_general(u2, v2, (((1,), (1,)), ((), ())),
                         preferred_element_type=f32)
    e2 = jnp.where(e2 > 0, e2, NEG_SLOPE * e2) + bias
    e2 = e2 - jnp.max(e2, axis=-1, keepdims=True)
    p2 = jnp.exp(e2)
    l2 = jnp.sum(p2, axis=-1, keepdims=True)
    out_ref[...] = (jnp.dot(p2, h2, preferred_element_type=f32) / l2).astype(out_ref.dtype)


def _adjacency_bias(edge_index, num_nodes):
    """Dense additive attention bias from edge_index: 0 on edges/self-loops, -1e30 elsewhere."""
    src, dst = edge_index[0], edge_index[1]
    adj = jnp.zeros((num_nodes, num_nodes), jnp.float32).at[dst, src].set(1.0)
    adj = jnp.minimum(adj + jnp.eye(num_nodes, dtype=jnp.float32), 1.0)    # self-loops
    return (1.0 - adj) * jnp.float32(-1e30)


def encoder_forward(x, edge_index, params, *, num_heads=3):
    """Pallas-backed EncoderModel.forward(x, edge_index).

    x:          [N, node_dim] float32 node features
    edge_index: [2, E] int32 (row 0 = src, row 1 = dst)
    returns:    [N, embed_dim] float32 node embeddings
    """
    N, _ = x.shape
    hidden_dim = params["a1_src"].shape[1]
    embed_dim = params["w2"].shape[1]

    adj_bias = _adjacency_bias(edge_index, N)

    # Pack per-head attention vectors into one block-diagonal matrix so the kernel
    # gets all heads' src/dst scores from a single matmul.
    a1 = jnp.zeros((num_heads * hidden_dim, 2 * num_heads), jnp.float32)
    for hd in range(num_heads):
        sl = slice(hd * hidden_dim, (hd + 1) * hidden_dim)
        a1 = a1.at[sl, hd].set(params["a1_src"][hd])
        a1 = a1.at[sl, num_heads + hd].set(params["a1_dst"][hd])
    a2 = jnp.stack([params["a2_src"], params["a2_dst"]], axis=1)           # [embed, 2]

    # bf16 for the big MXU operands (halves HBM->VMEM bytes); f32 accumulation in-kernel.
    x_b = x.astype(jnp.bfloat16)
    w1_b = params["w1"].astype(jnp.bfloat16)
    w2_b = params["w2"].astype(jnp.bfloat16)

    kernel = functools.partial(_gat_encoder_kernel,
                               num_heads=num_heads, hidden_dim=hidden_dim)
    vmem = pl.BlockSpec(memory_space=pltpu.MemorySpace.VMEM)

    # Single fused invocation, no grid: whole (tiny) problem lives in VMEM, no pipeline
    # setup or double-buffered input copies.
    return pl.pallas_call(
        kernel,
        out_shape=jax.ShapeDtypeStruct((N, embed_dim), jnp.float32),
        in_specs=[vmem] * 6,
        out_specs=vmem,
    )(x_b, adj_bias, w1_b, a1, w2_b, a2)


def _reference(x, edge_index, params, *, num_heads=3):
    """Pure-JAX reference mirroring the kernel math (same bf16 input rounding)."""
    N = x.shape[0]
    hidden_dim = params["a1_src"].shape[1]
    bias = _adjacency_bias(edge_index, N)
    f32 = jnp.float32

    xb = x.astype(jnp.bfloat16).astype(f32)
    w1 = params["w1"].astype(jnp.bfloat16).astype(f32)
    w2 = params["w2"].astype(jnp.bfloat16).astype(f32)

    h_all = xb @ w1
    heads = []
    for hd in range(num_heads):
        h = h_all[:, hd * hidden_dim:(hd + 1) * hidden_dim]
        s_src = h @ params["a1_src"][hd]
        s_dst = h @ params["a1_dst"][hd]
        e = s_src[:, None] + s_dst[None, :]
        e = jnp.where(e > 0, e, NEG_SLOPE * e) + bias
        e = e - e.max(axis=-1, keepdims=True)
        p = jnp.exp(e)
        heads.append((p @ h) / p.sum(axis=-1, keepdims=True))
    h1 = jnp.concatenate(heads, axis=-1)
    h1 = jnp.where(h1 > 0, h1, jnp.exp(h1) - 1.0)

    h2 = h1.astype(jnp.bfloat16).astype(f32) @ w2
    s_src2 = h2 @ params["a2_src"]
    s_dst2 = h2 @ params["a2_dst"]
    e2 = s_src2[:, None] + s_dst2[None, :]
    e2 = jnp.where(e2 > 0, e2, NEG_SLOPE * e2) + bias
    e2 = e2 - e2.max(axis=-1, keepdims=True)
    p2 = jnp.exp(e2)
    return (p2 @ h2) / p2.sum(axis=-1, keepdims=True)


if __name__ == "__main__":
    # Small shapes consistent with EncoderModel(node_dim, hidden_dim, embed_dim, num_heads=3).
    N = 32            # nodes in the graph
    E = 96            # directed edges
    node_dim = 16
    hidden_dim = 32
    embed_dim = 128   # encoder out_size; 128 keeps the output lane-dense
    num_heads = 3

    key = jax.random.PRNGKey(0)
    ks = jax.random.split(key, 9)

    x = jax.random.normal(ks[0], (N, node_dim), dtype=jnp.float32)
    src = jax.random.randint(ks[1], (E,), 0, N)
    dst = jax.random.randint(ks[2], (E,), 0, N)
    edge_index = jnp.stack([src, dst], axis=0).astype(jnp.int32)

    params = {
        "w1":     0.2 * jax.random.normal(ks[3], (node_dim, num_heads * hidden_dim), jnp.float32),
        "a1_src": 0.2 * jax.random.normal(ks[4], (num_heads, hidden_dim), jnp.float32),
        "a1_dst": 0.2 * jax.random.normal(ks[5], (num_heads, hidden_dim), jnp.float32),
        "w2":     0.2 * jax.random.normal(ks[6], (num_heads * hidden_dim, embed_dim), jnp.float32),
        "a2_src": 0.2 * jax.random.normal(ks[7], (embed_dim,), jnp.float32),
        "a2_dst": 0.2 * jax.random.normal(ks[8], (embed_dim,), jnp.float32),
    }

    out = encoder_forward(x, edge_index, params, num_heads=num_heads)
    out = jax.block_until_ready(out)

    ref = _reference(x, edge_index, params, num_heads=num_heads)
    assert out.shape == (N, embed_dim)
    assert bool(jnp.allclose(out, ref, rtol=2e-3, atol=2e-3)), "mismatch vs reference"

    # TODO(synk): GraphAttentionNetwork internals are not in the prompt; a standard 2-layer
    # GAT (multi-head concat + ELU, single-head output, no linear bias) is assumed, and
    # dropout (training-time only) is omitted from the inference kernel.
    print("KERNEL_OK")
</pallas_src>

<mosaic_0001>
module attributes {stable_mosaic.version = 11 : i64} {
  func.func @_gat_encoder_kernel(%arg0: memref<32x16xbf16, #tpu.memory_space<vmem>>, %arg1: memref<32x32xf32, #tpu.memory_space<vmem>>, %arg2: memref<16x96xbf16, #tpu.memory_space<vmem>>, %arg3: memref<96x6xf32, #tpu.memory_space<vmem>>, %arg4: memref<96x128xbf16, #tpu.memory_space<vmem>>, %arg5: memref<128x2xf32, #tpu.memory_space<vmem>>, %arg6: memref<32x128xf32, #tpu.memory_space<vmem>>) attributes {dimension_semantics = [], scalar_prefetch = 0 : i64, scratch_operands = 0 : i64, tpu.core_type = #tpu.core_type<tc>} {
    %c0 = arith.constant 0 : index
    %c0_0 = arith.constant 0 : index
    %0 = vector.load %arg1[%c0, %c0_0] : memref<32x32xf32, #tpu.memory_space<vmem>>, vector<32x32xf32>
    %cst = arith.constant 1.000000e+00 : f32
    %1 = vector.broadcast %cst : f32 to vector<32x1xf32>
    %c0_1 = arith.constant 0 : index
    %c0_2 = arith.constant 0 : index
    %2 = vector.load %arg0[%c0_1, %c0_2] : memref<32x16xbf16, #tpu.memory_space<vmem>>, vector<32x16xbf16>
    %c0_3 = arith.constant 0 : index
    %c0_4 = arith.constant 0 : index
    %3 = vector.load %arg2[%c0_3, %c0_4] : memref<16x96xbf16, #tpu.memory_space<vmem>>, vector<16x96xbf16>
    %cst_5 = arith.constant dense<0.000000e+00> : vector<32x96xf32>
    %4 = tpu.matmul %2, %3, %cst_5 {dimension_numbers = #tpu.dot_dimension_numbers<[1], [0], [0], [1], [0, 0, 1, 1], [], []>} : vector<32x16xbf16>, vector<16x96xbf16>, vector<32x96xf32> -> vector<32x96xf32>
    %c0_6 = arith.constant 0 : index
    %c0_7 = arith.constant 0 : index
    %5 = vector.load %arg3[%c0_6, %c0_7] : memref<96x6xf32, #tpu.memory_space<vmem>>, vector<96x6xf32>
    %cst_8 = arith.constant dense<0.000000e+00> : vector<32x6xf32>
    %6 = tpu.matmul %4, %5, %cst_8 {dimension_numbers = #tpu.dot_dimension_numbers<[1], [0], [0], [1], [0, 0, 1, 1], [], []>} : vector<32x96xf32>, vector<96x6xf32>, vector<32x6xf32> -> vector<32x6xf32>
    %7 = vector.extract_strided_slice %4 {offsets = [0, 0], sizes = [32, 32], strides = [1, 1]} : vector<32x96xf32> to vector<32x32xf32>
    %8 = vector.extract_strided_slice %6 {offsets = [0, 0], sizes = [32, 1], strides = [1, 1]} : vector<32x6xf32> to vector<32x1xf32>
    %9 = vector.extract_strided_slice %6 {offsets = [0, 3], sizes = [32, 1], strides = [1, 1]} : vector<32x6xf32> to vector<32x1xf32>
    %10 = tpu.concatenate %8, %1 in 1 : vector<32x1xf32>, vector<32x1xf32> -> vector<32x2xf32>
    %11 = tpu.concatenate %1, %9 in 1 : vector<32x1xf32>, vector<32x1xf32> -> vector<32x2xf32>
    %cst_9 = arith.constant dense<0.000000e+00> : vector<32x32xf32>
    %12 = tpu.matmul %10, %11, %cst_9 {dimension_numbers = #tpu.dot_dimension_numbers<[1], [1], [0], [0], [0, 0, 1, 0], [], []>} : vector<32x2xf32>, vector<32x2xf32>, vector<32x32xf32> -> vector<32x32xf32>
    %cst_10 = arith.constant 0.000000e+00 : f32
    %13 = vector.broadcast %cst_10 : f32 to vector<32x32xf32>
    %14 = arith.cmpf ogt, %12, %13 : vector<32x32xf32>
    %cst_11 = arith.constant 2.000000e-01 : f32
    %15 = vector.broadcast %cst_11 : f32 to vector<32x32xf32>
    %16 = arith.mulf %15, %12 : vector<32x32xf32>
    %17 = arith.select %14, %12, %16 : vector<32x32xi1>, vector<32x32xf32>
    %18 = arith.addf %17, %0 : vector<32x32xf32>
    %cst_12 = arith.constant dense<0xFF800000> : vector<32xf32>
    %19 = vector.multi_reduction <maximumf>, %18, %cst_12 [1] : vector<32x32xf32> to vector<32xf32>
    %20 = vector.shape_cast %19 : vector<32xf32> to vector<32x1xf32>
    %21 = vector.broadcast %20 : vector<32x1xf32> to vector<32x32xf32>
    %22 = arith.subf %18, %21 : vector<32x32xf32>
    %23 = math.exp %22 : vector<32x32xf32>
    %cst_13 = arith.constant dense<0.000000e+00> : vector<32xf32>
    %24 = vector.multi_reduction <add>, %23, %cst_13 [1] : vector<32x32xf32> to vector<32xf32>
    %25 = vector.shape_cast %24 : vector<32xf32> to vector<32x1xf32>
    %cst_14 = arith.constant dense<0.000000e+00> : vector<32x32xf32>
    %26 = tpu.matmul %23, %7, %cst_14 {dimension_numbers = #tpu.dot_dimension_numbers<[1], [0], [0], [1], [0, 0, 1, 1], [], []>} : vector<32x32xf32>, vector<32x32xf32>, vector<32x32xf32> -> vector<32x32xf32>
    %27 = vector.broadcast %25 : vector<32x1xf32> to vector<32x32xf32>
    %28 = arith.divf %26, %27 : vector<32x32xf32>
    %29 = vector.extract_strided_slice %4 {offsets = [0, 32], sizes = [32, 32], strides = [1, 1]} : vector<32x96xf32> to vector<32x32xf32>
    %30 = vector.extract_strided_slice %6 {offsets = [0, 1], sizes = [32, 1], strides = [1, 1]} : vector<32x6xf32> to vector<32x1xf32>
    %31 = vector.extract_strided_slice %6 {offsets = [0, 4], sizes = [32, 1], strides = [1, 1]} : vector<32x6xf32> to vector<32x1xf32>
    %32 = tpu.concatenate %30, %1 in 1 : vector<32x1xf32>, vector<32x1xf32> -> vector<32x2xf32>
    %33 = tpu.concatenate %1, %31 in 1 : vector<32x1xf32>, vector<32x1xf32> -> vector<32x2xf32>
    %cst_15 = arith.constant dense<0.000000e+00> : vector<32x32xf32>
    %34 = tpu.matmul %32, %33, %cst_15 {dimension_numbers = #tpu.dot_dimension_numbers<[1], [1], [0], [0], [0, 0, 1, 0], [], []>} : vector<32x2xf32>, vector<32x2xf32>, vector<32x32xf32> -> vector<32x32xf32>
    %cst_16 = arith.constant 0.000000e+00 : f32
    %35 = vector.broadcast %cst_16 : f32 to vector<32x32xf32>
    %36 = arith.cmpf ogt, %34, %35 : vector<32x32xf32>
    %cst_17 = arith.constant 2.000000e-01 : f32
    %37 = vector.broadcast %cst_17 : f32 to vector<32x32xf32>
    %38 = arith.mulf %37, %34 : vector<32x32xf32>
    %39 = arith.select %36, %34, %38 : vector<32x32xi1>, vector<32x32xf32>
    %40 = arith.addf %39, %0 : vector<32x32xf32>
    %cst_18 = arith.constant dense<0xFF800000> : vector<32xf32>
    %41 = vector.multi_reduction <maximumf>, %40, %cst_18 [1] : vector<32x32xf32> to vector<32xf32>
    %42 = vector.shape_cast %41 : vector<32xf32> to vector<32x1xf32>
    %43 = vector.broadcast %42 : vector<32x1xf32> to vector<32x32xf32>
    %44 = arith.subf %40, %43 : vector<32x32xf32>
    %45 = math.exp %44 : vector<32x32xf32>
    %cst_19 = arith.constant dense<0.000000e+00> : vector<32xf32>
    %46 = vector.multi_reduction <add>, %45, %cst_19 [1] : vector<32x32xf32> to vector<32xf32>
    %47 = vector.shape_cast %46 : vector<32xf32> to vector<32x1xf32>
    %cst_20 = arith.constant dense<0.000000e+00> : vector<32x32xf32>
    %48 = tpu.matmul %45, %29, %cst_20 {dimension_numbers = #tpu.dot_dimension_numbers<[1], [0], [0], [1], [0, 0, 1, 1], [], []>} : vector<32x32xf32>, vector<32x32xf32>, vector<32x32xf32> -> vector<32x32xf32>
    %49 = vector.broadcast %47 : vector<32x1xf32> to vector<32x32xf32>
    %50 = arith.divf %48, %49 : vector<32x32xf32>
    %51 = vector.extract_strided_slice %4 {offsets = [0, 64], sizes = [32, 32], strides = [1, 1]} : vector<32x96xf32> to vector<32x32xf32>
    %52 = vector.extract_strided_slice %6 {offsets = [0, 2], sizes = [32, 1], strides = [1, 1]} : vector<32x6xf32> to vector<32x1xf32>
    %53 = vector.extract_strided_slice %6 {offsets = [0, 5], sizes = [32, 1], strides = [1, 1]} : vector<32x6xf32> to vector<32x1xf32>
    %54 = tpu.concatenate %52, %1 in 1 : vector<32x1xf32>, vector<32x1xf32> -> vector<32x2xf32>
    %55 = tpu.concatenate %1, %53 in 1 : vector<32x1xf32>, vector<32x1xf32> -> vector<32x2xf32>
    %cst_21 = arith.constant dense<0.000000e+00> : vector<32x32xf32>
    %56 = tpu.matmul %54, %55, %cst_21 {dimension_numbers = #tpu.dot_dimension_numbers<[1], [1], [0], [0], [0, 0, 1, 0], [], []>} : vector<32x2xf32>, vector<32x2xf32>, vector<32x32xf32> -> vector<32x32xf32>
    %cst_22 = arith.constant 0.000000e+00 : f32
    %57 = vector.broadcast %cst_22 : f32 to vector<32x32xf32>
    %58 = arith.cmpf ogt, %56, %57 : vector<32x32xf32>
    %cst_23 = arith.constant 2.000000e-01 : f32
    %59 = vector.broadcast %cst_23 : f32 to vector<32x32xf32>
    %60 = arith.mulf %59, %56 : vector<32x32xf32>
    %61 = arith.select %58, %56, %60 : vector<32x32xi1>, vector<32x32xf32>
    %62 = arith.addf %61, %0 : vector<32x32xf32>
    %cst_24 = arith.constant dense<0xFF800000> : vector<32xf32>
    %63 = vector.multi_reduction <maximumf>, %62, %cst_24 [1] : vector<32x32xf32> to vector<32xf32>
    %64 = vector.shape_cast %63 : vector<32xf32> to vector<32x1xf32>
    %65 = vector.broadcast %64 : vector<32x1xf32> to vector<32x32xf32>
    %66 = arith.subf %62, %65 : vector<32x32xf32>
    %67 = math.exp %66 : vector<32x32xf32>
    %cst_25 = arith.constant dense<0.000000e+00> : vector<32xf32>
    %68 = vector.multi_reduction <add>, %67, %cst_25 [1] : vector<32x32xf32> to vector<32xf32>
    %69 = vector.shape_cast %68 : vector<32xf32> to vector<32x1xf32>
    %cst_26 = arith.constant dense<0.000000e+00> : vector<32x32xf32>
    %70 = tpu.matmul %67, %51, %cst_26 {dimension_numbers = #tpu.dot_dimension_numbers<[1], [0], [0], [1], [0, 0, 1, 1], [], []>} : vector<32x32xf32>, vector<32x32xf32>, vector<32x32xf32> -> vector<32x32xf32>
    %71 = vector.broadcast %69 : vector<32x1xf32> to vector<32x32xf32>
    %72 = arith.divf %70, %71 : vector<32x32xf32>
    %73 = tpu.concatenate %28, %50, %72 in 1 : vector<32x32xf32>, vector<32x32xf32>, vector<32x32xf32> -> vector<32x96xf32>
    %cst_27 = arith.constant 0.000000e+00 : f32
    %74 = vector.broadcast %cst_27 : f32 to vector<32x96xf32>
    %75 = arith.cmpf ogt, %73, %74 : vector<32x96xf32>
    %76 = math.exp %73 : vector<32x96xf32>
    %cst_28 = arith.constant 1.000000e+00 : f32
    %77 = vector.broadcast %cst_28 : f32 to vector<32x96xf32>
    %78 = arith.subf %76, %77 : vector<32x96xf32>
    %79 = arith.select %75, %73, %78 : vector<32x96xi1>, vector<32x96xf32>
    %80 = arith.truncf %79 : vector<32x96xf32> to vector<32x96xbf16>
    %c0_29 = arith.constant 0 : index
    %c0_30 = arith.constant 0 : index
    %81 = vector.load %arg4[%c0_29, %c0_30] : memref<96x128xbf16, #tpu.memory_space<vmem>>, vector<96x128xbf16>
    %cst_31 = arith.constant dense<0.000000e+00> : vector<32x128xf32>
    %82 = tpu.matmul %80, %81, %cst_31 {dimension_numbers = #tpu.dot_dimension_numbers<[1], [0], [0], [1], [0, 0, 1, 1], [], []>} : vector<32x96xbf16>, vector<96x128xbf16>, vector<32x128xf32> -> vector<32x128xf32>
    %c0_32 = arith.constant 0 : index
    %c0_33 = arith.constant 0 : index
    %83 = vector.load %arg5[%c0_32, %c0_33] : memref<128x2xf32, #tpu.memory_space<vmem>>, vector<128x2xf32>
    %cst_34 = arith.constant dense<0.000000e+00> : vector<32x2xf32>
    %84 = tpu.matmul %82, %83, %cst_34 {dimension_numbers = #tpu.dot_dimension_numbers<[1], [0], [0], [1], [0, 0, 1, 1], [], []>} : vector<32x128xf32>, vector<128x2xf32>, vector<32x2xf32> -> vector<32x2xf32>
    %85 = vector.extract_strided_slice %84 {offsets = [0, 0], sizes = [32, 1], strides = [1, 1]} : vector<32x2xf32> to vector<32x1xf32>
    %86 = tpu.concatenate %85, %1 in 1 : vector<32x1xf32>, vector<32x1xf32> -> vector<32x2xf32>
    %87 = vector.extract_strided_slice %84 {offsets = [0, 1], sizes = [32, 1], strides = [1, 1]} : vector<32x2xf32> to vector<32x1xf32>
    %88 = tpu.concatenate %1, %87 in 1 : vector<32x1xf32>, vector<32x1xf32> -> vector<32x2xf32>
    %cst_35 = arith.constant dense<0.000000e+00> : vector<32x32xf32>
    %89 = tpu.matmul %86, %88, %cst_35 {dimension_numbers = #tpu.dot_dimension_numbers<[1], [1], [0], [0], [0, 0, 1, 0], [], []>} : vector<32x2xf32>, vector<32x2xf32>, vector<32x32xf32> -> vector<32x32xf32>
    %cst_36 = arith.constant 0.000000e+00 : f32
    %90 = vector.broadcast %cst_36 : f32 to vector<32x32xf32>
    %91 = arith.cmpf ogt, %89, %90 : vector<32x32xf32>
    %cst_37 = arith.constant 2.000000e-01 : f32
    %92 = vector.broadcast %cst_37 : f32 to vector<32x32xf32>
    %93 = arith.mulf %92, %89 : vector<32x32xf32>
    %94 = arith.select %91, %89, %93 : vector<32x32xi1>, vector<32x32xf32>
    %95 = arith.addf %94, %0 : vector<32x32xf32>
    %cst_38 = arith.constant dense<0xFF800000> : vector<32xf32>
    %96 = vector.multi_reduction <maximumf>, %95, %cst_38 [1] : vector<32x32xf32> to vector<32xf32>
    %97 = vector.shape_cast %96 : vector<32xf32> to vector<32x1xf32>
    %98 = vector.broadcast %97 : vector<32x1xf32> to vector<32x32xf32>
    %99 = arith.subf %95, %98 : vector<32x32xf32>
    %100 = math.exp %99 : vector<32x32xf32>
    %cst_39 = arith.constant dense<0.000000e+00> : vector<32xf32>
    %101 = vector.multi_reduction <add>, %100, %cst_39 [1] : vector<32x32xf32> to vector<32xf32>
    %102 = vector.shape_cast %101 : vector<32xf32> to vector<32x1xf32>
    %cst_40 = arith.constant dense<0.000000e+00> : vector<32x128xf32>
    %103 = tpu.matmul %100, %82, %cst_40 {dimension_numbers = #tpu.dot_dimension_numbers<[1], [0], [0], [1], [0, 0, 1, 1], [], []>} : vector<32x32xf32>, vector<32x128xf32>, vector<32x128xf32> -> vector<32x128xf32>
    %104 = vector.broadcast %102 : vector<32x1xf32> to vector<32x128xf32>
    %105 = arith.divf %103, %104 : vector<32x128xf32>
    %c0_41 = arith.constant 0 : index
    %c0_42 = arith.constant 0 : index
    %106 = vector.load %arg6[%c0_41, %c0_42] : memref<32x128xf32, #tpu.memory_space<vmem>>, vector<32x128xf32>
    tpu.vector_store %arg6[%c0_41, %c0_42], %105 {strides = array<i32>} : memref<32x128xf32, #tpu.memory_space<vmem>>, vector<32x128xf32>,
    return
  }
}

</mosaic_0001>

<llo_original>
// kernel: tpu_custom_call.1
$region0: #{tpu_custom_call.1}
  #allocation0 [shape = 'u32[]', space=smem, size = 0x4, offset = 0x4, fixed_abs, tag = 'smem constant byte address 0x4 - core index']
  #allocation1 [shape = 'u32[144,128]{1,0:T(1,128)}', space=vmem, size = 0x12000, scoped, tag = 'internal scratch']
  %s0 = inlined_call_operand.vmem [shape: bf16[32,16], index: 0, kind: input, shape index: {}]
  %s1 = inlined_call_operand.vmem [shape: f32[32,32], index: 1, kind: input, shape index: {}]
  %s2 = inlined_call_operand.vmem [shape: bf16[16,96], index: 2, kind: input, shape index: {}]
  %s3 = inlined_call_operand.vmem [shape: f32[96,6], index: 3, kind: input, shape index: {}]
  %s4 = inlined_call_operand.vmem [shape: bf16[96,128], index: 4, kind: input, shape index: {}]
  %s5 = inlined_call_operand.vmem [shape: f32[128,2], index: 5, kind: input, shape index: {}]
  %s6 = inlined_call_operand.hbm [shape: f32[32,128], index: 6, kind: output, shape index: {}]
  %s7 = sld [smem:[#allocation0]]
  $region34: #{tpu_custom_call.1} parent=0
    _
  %s9 = ssub.s32 1, %s7
  %s10 = scalar_select 0, %s9, %s7
  $region1: #{tpu_custom_call.1} parent=0
    #allocation2 [shape = 'u8[16384]{0}', space=vmem, size = 0x4000, scoped, tag = 'output window, operand 0, single buffered']
    #allocation3 [shape = 's32[1]{0}', space=sflag, size = 0x4, scoped, tag = 'scoped memory for tpu_custom_call.1']
    %11 = vsyncpa [#allocation3], 0
    // Predicated region
    $region2: #{tpu_custom_call.1} parent=1 // pred_check
      _
    $region3: #{tpu_custom_call.1} parent=1 // pred_check_branch
      %13 = sbr.rel (0) target = $region5
    $region4: #{tpu_custom_call.1} parent=1 // pred_region
      _
    $region5: #{tpu_custom_call.1} parent=1 // pred_fallthru
      _
    // Predicated region
    $region6: #{tpu_custom_call.1} parent=1 // pred_check
      _
    $region7: #{tpu_custom_call.1} parent=1 // pred_check_branch
      %15 = sbr.rel (0) target = $region9
    $region8: #{tpu_custom_call.1} parent=1 // pred_region
      _
    $region9: #{tpu_custom_call.1} parent=1 // pred_fallthru
      _
    // Predicated region
    $region10: #{tpu_custom_call.1} parent=1 // pred_check
      _
    $region11: #{tpu_custom_call.1} parent=1 // pred_check_branch
      %17 = sbr.rel (0) target = $region13
    $region12: #{tpu_custom_call.1} parent=1 // pred_region
      _
    $region13: #{tpu_custom_call.1} parent=1 // pred_fallthru
      _
    // Predicated region
    $region14: #{tpu_custom_call.1} parent=1 // pred_check
      _
    $region15: #{tpu_custom_call.1} parent=1 // pred_check_branch
      %19 = sbr.rel (0) target = $region17
    $region16: #{tpu_custom_call.1} parent=1 // pred_region
      _
    $region17: #{tpu_custom_call.1} parent=1 // pred_fallthru
      _
    // Predicated region
    $region18: #{tpu_custom_call.1} parent=1 // pred_check
      _
    $region19: #{tpu_custom_call.1} parent=1 // pred_check_branch
      %21 = sbr.rel (0) target = $region21
    $region20: #{tpu_custom_call.1} parent=1 // pred_region
      _
    $region21: #{tpu_custom_call.1} parent=1 // pred_fallthru
      _
    // Predicated region
    $region22: #{tpu_custom_call.1} parent=1 // pred_check
      _
    $region23: #{tpu_custom_call.1} parent=1 // pred_check_branch
      %23 = sbr.rel (0) target = $region25
    $region24: #{tpu_custom_call.1} parent=1 // pred_region
      _
    $region25: #{tpu_custom_call.1} parent=1 // pred_fallthru
      _
    %v25 = vld [vmem:[%s1] sm:$0xff]
    %v26 = vld [vmem:[%s1 + $0x8] sm:$0xff]
    %v27 = vld [vmem:[%s1 + $0x10] sm:$0xff]
    %v28 = vld [vmem:[%s1 + $0x18] sm:$0xff]
    %v29 = vld [vmem:[%s0] sm:$0xf]
    %v30 = vld [vmem:[%s0 + $0x4] sm:$0xf]
    %v31 = vld [vmem:[%s0 + $0x8] sm:$0xf]
    %v32 = vld [vmem:[%s0 + $0xc] sm:$0xf]
    %v33 = vld [vmem:[%s2] sm:$0xf]
    %v34 = vld [vmem:[%s2 + $0x4] sm:$0xf]
    %v39 = vunpack.c.l.b16 %v29
    %v40 = vunpack.c.l.b16 %v30
    %v41 = vunpack.c.l.b16 %v31
    %v42 = vunpack.c.l.b16 %v32
    %v43 = vpack.c.b16 %v40, %v39
    %v44 = vpack.c.b16 %v42, %v41
    %v47 = vunpack.c.l.b16 %v33
    %v48 = vunpack.c.l.b16 %v34
    %v49 = vpack.c.b16 %v48, %v47
    %vm51 = vcmask 130048
    %v53 = vsel %vm51, %v43, 0
    %v56 = vsel %vm51, %v44, 0
    %58 = vmatprep.subr.bf16.mxu0 0
    %59 = vmatpush1.bf16.msra.mxu0 0
    %60 = vmatprep.subr.bf16.mxu0 0
    %61 = vmatpush1.bf16.msra.mxu0 0
    %62 = vmatprep.subr.bf16.mxu0 0
    %63 = vmatpush1.bf16.msra.mxu0 0
    %64 = vmatprep.subr.bf16.mxu0 0
    %65 = vmatpush1.bf16.msra.mxu0 0
    %66 = vmatprep.subr.bf16.mxu0 0
    %67 = vmatpush1.bf16.msra.mxu0 0
    %68 = vmatprep.subr.bf16.mxu0 0
    %69 = vmatpush1.bf16.msra.mxu0 0
    %70 = vmatprep.subr.bf16.mxu0 0
    %71 = vmatpush1.bf16.msra.mxu0 0
    %72 = vmatprep.subr.bf16.mxu0 0
    %73 = vmatpush1.bf16.msra.mxu0 %v49
    %74 = vmatprep.subr.bf16.mxu0 0
    %75 = vmatpush2.bf16.msra.mxu0 0
    %76 = vmatprep.subr.bf16.mxu0 0
    %77 = vmatpush2.bf16.msra.mxu0 0
    %78 = vmatprep.subr.bf16.mxu0 0
    %79 = vmatpush2.bf16.msra.mxu0 0
    %80 = vmatprep.subr.bf16.mxu0 0
    %81 = vmatpush2.bf16.msra.mxu0 0
    %82 = vmatprep.subr.bf16.mxu0 0
    %83 = vmatpush2.bf16.msra.mxu0 0
    %84 = vmatprep.subr.bf16.mxu0 0
    %85 = vmatpush2.bf16.msra.mxu0 0
    %86 = vmatprep.subr.bf16.mxu0 0
    %87 = vmatpush2.bf16.msra.mxu0 0
    %88 = vmatprep.subr.bf16.mxu0 0
    %89 = vmatpush2.bf16.msra.mxu0 0
    %90 = vmatprep.mubr.bf16.mxu0 0
    %91 = vmatmul.mubr.bf16.gmra.mxu0 %v53
    %v92 = vpop.f32.mrf.mxu0
    %v93 = vadd.f32 0.0, %v92
    %v94 = vpop.f32.mrf.mxu0
    %v95 = vpop.f32.mrf.mxu0
    %v96 = vadd.f32 0.0, %v95
    %v97 = vpop.f32.mrf.mxu0
    %98 = vmatprep.mubr.bf16.mxu0 0
    %99 = vmatmul.mubr.bf16.gmra.mxu0 %v56
    %v100 = vpop.f32.mrf.mxu0
    %v101 = vadd.f32 0.0, %v100
    %v102 = vpop.f32.mrf.mxu0
    %v103 = vpop.f32.mrf.mxu0
    %v104 = vadd.f32 0.0, %v103
    %v105 = vpop.f32.mrf.mxu0
    %106 = vdwg.mxu0
    %v107 = vld [vmem:[%s3] sm:$0xff]
    %v108 = vld [vmem:[%s3 + $0x8] sm:$0xff]
    %v109 = vld [vmem:[%s3 + $0x10] sm:$0xff]
    %v110 = vld [vmem:[%s3 + $0x18] sm:$0xff]
    %v111 = vld [vmem:[%s3 + $0x20] sm:$0xff]
    %v112 = vld [vmem:[%s3 + $0x28] sm:$0xff]
    %v113 = vld [vmem:[%s3 + $0x30] sm:$0xff]
    %v114 = vld [vmem:[%s3 + $0x38] sm:$0xff]
    %v115 = vld [vmem:[%s3 + $0x40] sm:$0xff]
    %v116 = vld [vmem:[%s3 + $0x48] sm:$0xff]
    %v117 = vld [vmem:[%s3 + $0x50] sm:$0xff]
    %v118 = vld [vmem:[%s3 + $0x58] sm:$0xff]
    %vm119 = vcmask 785408
    %v121 = vsel %vm119, %v93, 0
    %v124 = vsel %vm119, %v96, 0
    %v127 = vsel %vm119, %v101, 0
    %v130 = vsel %vm119, %v104, 0
    %132 = vmatprep.subr.mxu0 0.0
    %133 = vmatpush1.msra.mxu0 0.0
    %134 = vmatprep.subr.mxu0 0.0
    %135 = vmatpush1.msra.mxu0 0.0
    %136 = vmatprep.subr.mxu0 0.0
    %137 = vmatpush1.msra.mxu0 0.0
    %138 = vmatprep.subr.mxu0 0.0
    %139 = vmatpush1.msra.mxu0 0.0
    %140 = vmatprep.subr.mxu0 0.0
    %141 = vmatpush1.msra.mxu0 %v118
    %142 = vmatprep.subr.mxu0 0.0
    %143 = vmatpush1.msra.mxu0 %v117
    %144 = vmatprep.subr.mxu0 0.0
    %145 = vmatpush1.msra.mxu0 %v116
    %146 = vmatprep.subr.mxu0 0.0
    %147 = vmatpush1.msra.mxu0 %v115
    %148 = vmatprep.subr.mxu0 0.0
    %149 = vmatpush1.msra.mxu0 %v114
    %150 = vmatprep.subr.mxu0 0.0
    %151 = vmatpush1.msra.mxu0 %v113
    %152 = vmatprep.subr.mxu0 0.0
    %153 = vmatpush1.msra.mxu0 %v112
    %154 = vmatprep.subr.mxu0 0.0
    %155 = vmatpush1.msra.mxu0 %v111
    %156 = vmatprep.subr.mxu0 0.0
    %157 = vmatpush1.msra.mxu0 %v110
    %158 = vmatprep.subr.mxu0 0.0
    %159 = vmatpush1.msra.mxu0 %v109
    %160 = vmatprep.subr.mxu0 0.0
    %161 = vmatpush1.msra.mxu0 %v108
    %162 = vmatprep.subr.mxu0 0.0
    %163 = vmatpush1.msra.mxu0 %v107
    %164 = vmatprep.subr.mxu0 0.0
    %165 = vmatpush2.msra.mxu0 0.0
    %166 = vmatprep.subr.mxu0 0.0
    %167 = vmatpush2.msra.mxu0 0.0
    %168 = vmatprep.subr.mxu0 0.0
    %169 = vmatpush2.msra.mxu0 0.0
    %170 = vmatprep.subr.mxu0 0.0
    %171 = vmatpush2.msra.mxu0 0.0
    %172 = vmatprep.subr.mxu0 0.0
    %173 = vmatpush2.msra.mxu0 0.0
    %174 = vmatprep.subr.mxu0 0.0
    %175 = vmatpush2.msra.mxu0 0.0
    %176 = vmatprep.subr.mxu0 0.0
    %177 = vmatpush2.msra.mxu0 0.0
    %178 = vmatprep.subr.mxu0 0.0
    %179 = vmatpush2.msra.mxu0 0.0
    %180 = vmatprep.subr.mxu0 0.0
    %181 = vmatpush2.msra.mxu0 0.0
    %182 = vmatprep.subr.mxu0 0.0
    %183 = vmatpush2.msra.mxu0 0.0
    %184 = vmatprep.subr.mxu0 0.0
    %185 = vmatpush2.msra.mxu0 0.0
    %186 = vmatprep.subr.mxu0 0.0
    %187 = vmatpush2.msra.mxu0 0.0
    %188 = vmatprep.subr.mxu0 0.0
    %189 = vmatpush2.msra.mxu0 0.0
    %190 = vmatprep.subr.mxu0 0.0
    %191 = vmatpush2.msra.mxu0 0.0
    %192 = vmatprep.subr.mxu0 0.0
    %193 = vmatpush2.msra.mxu0 0.0
    %194 = vmatprep.subr.mxu0 0.0
    %195 = vmatpush2.msra.mxu0 0.0
    %196 = vmatprep.mubr.f32.mxu0 0.0
    %197 = vmatmul.mubr.f32.gmra.mxu0 %v121
    %v198 = vpop.f32.mrf.mxu0
    %v199 = vadd.f32 0.0, %v198
    %v200 = vpop.f32.mrf.mxu0
    %201 = vmatprep.mubr.f32.mxu0 0.0
    %202 = vmatmul.mubr.f32.gmra.mxu0 %v124
    %v203 = vpop.f32.mrf.mxu0
    %v204 = vadd.f32 0.0, %v203
    %v205 = vpop.f32.mrf.mxu0
    %206 = vmatprep.mubr.f32.mxu0 0.0
    %207 = vmatmul.mubr.f32.gmra.mxu0 %v127
    %v208 = vpop.f32.mrf.mxu0
    %v209 = vadd.f32 0.0, %v208
    %v210 = vpop.f32.mrf.mxu0
    %211 = vmatprep.mubr.f32.mxu0 0.0
    %212 = vmatmul.mubr.f32.gmra.mxu0 %v130
    %v213 = vpop.f32.mrf.mxu0
    %v214 = vadd.f32 0.0, %v213
    %v215 = vpop.f32.mrf.mxu0
    %216 = vdwg.mxu0
    %vm217 = vcmask 7168
    %v218 = vsel %vm217, %v199, 1.0
    %v219 = vsel %vm217, %v204, 1.0
    %v220 = vsel %vm217, %v209, 1.0
    %v221 = vsel %vm217, %v214, 1.0
    %226 = vrot.lane.b32.xlu0 %v199, 126
    %v227 = vpop.permute.xlu0 %226
    %228 = vrot.lane.b32.xlu0 %v204, 126
    %v229 = vpop.permute.xlu0 %228
    %230 = vrot.lane.b32.xlu0 %v209, 126
    %v231 = vpop.permute.xlu0 %230
    %232 = vrot.lane.b32.xlu0 %v214, 126
    %v233 = vpop.permute.xlu0 %232
    %v238 = vsel %vm217, 1.0, %v227
    %v239 = vsel %vm217, 1.0, %v229
    %v240 = vsel %vm217, 1.0, %v231
    %v241 = vsel %vm217, 1.0, %v233
    %vm242 = vcmask 15360
    %v244 = vsel %vm242, %v218, 0
    %v247 = vsel %vm242, %v219, 0
    %v250 = vsel %vm242, %v220, 0
    %v253 = vsel %vm242, %v221, 0
    %v256 = vsel %vm242, %v238, 0
    %v259 = vsel %vm242, %v239, 0
    %v262 = vsel %vm242, %v240, 0
    %v265 = vsel %vm242, %v241, 0
    %267 = vmatprep.subr.mxu0 0.0
    %268 = vmatpush1.xpose.msra.mxu0 0.0
    %269 = vmatprep.subr.mxu0 0.0
    %270 = vmatpush1.xpose.msra.mxu0 0.0
    %271 = vmatprep.subr.mxu0 0.0
    %272 = vmatpush1.xpose.msra.mxu0 0.0
    %273 = vmatprep.subr.mxu0 0.0
    %274 = vmatpush1.xpose.msra.mxu0 0.0
    %275 = vmatprep.subr.mxu0 0.0
    %276 = vmatpush1.xpose.msra.mxu0 0.0
    %277 = vmatprep.subr.mxu0 0.0
    %278 = vmatpush1.xpose.msra.mxu0 0.0
    %279 = vmatprep.subr.mxu0 0.0
    %280 = vmatpush1.xpose.msra.mxu0 0.0
    %281 = vmatprep.subr.mxu0 0.0
    %282 = vmatpush1.xpose.msra.mxu0 0.0
    %283 = vmatprep.subr.mxu0 0.0
    %284 = vmatpush1.xpose.msra.mxu0 0.0
    %285 = vmatprep.subr.mxu0 0.0
    %286 = vmatpush1.xpose.msra.mxu0 0.0
    %287 = vmatprep.subr.mxu0 0.0
    %288 = vmatpush1.xpose.msra.mxu0 0.0
    %289 = vmatprep.subr.mxu0 0.0
    %290 = vmatpush1.xpose.msra.mxu0 0.0
    %291 = vmatprep.subr.mxu0 0.0
    %292 = vmatpush1.xpose.msra.mxu0 %v265
    %293 = vmatprep.subr.mxu0 0.0
    %294 = vmatpush1.xpose.msra.mxu0 %v262
    %295 = vmatprep.subr.mxu0 0.0
    %296 = vmatpush1.xpose.msra.mxu0 %v259
    %297 = vmatprep.subr.mxu0 0.0
    %298 = vmatpush1.xpose.msra.mxu0 %v256
    %299 = vmatprep.subr.mxu0 0.0
    %300 = vmatpush2.xpose.msra.mxu0 0.0
    %301 = vmatprep.subr.mxu0 0.0
    %302 = vmatpush2.xpose.msra.mxu0 0.0
    %303 = vmatprep.subr.mxu0 0.0
    %304 = vmatpush2.xpose.msra.mxu0 0.0
    %305 = vmatprep.subr.mxu0 0.0
    %306 = vmatpush2.xpose.msra.mxu0 0.0
    %307 = vmatprep.subr.mxu0 0.0
    %308 = vmatpush2.xpose.msra.mxu0 0.0
    %309 = vmatprep.subr.mxu0 0.0
    %310 = vmatpush2.xpose.msra.mxu0 0.0
    %311 = vmatprep.subr.mxu0 0.0
    %312 = vmatpush2.xpose.msra.mxu0 0.0
    %313 = vmatprep.subr.mxu0 0.0
    %314 = vmatpush2.xpose.msra.mxu0 0.0
    %315 = vmatprep.subr.mxu0 0.0
    %316 = vmatpush2.xpose.msra.mxu0 0.0
    %317 = vmatprep.subr.mxu0 0.0
    %318 = vmatpush2.xpose.msra.mxu0 0.0
    %319 = vmatprep.subr.mxu0 0.0
    %320 = vmatpush2.xpose.msra.mxu0 0.0
    %321 = vmatprep.subr.mxu0 0.0
    %322 = vmatpush2.xpose.msra.mxu0 0.0
    %323 = vmatprep.subr.mxu0 0.0
    %324 = vmatpush2.xpose.msra.mxu0 0.0
    %325 = vmatprep.subr.mxu0 0.0
    %326 = vmatpush2.xpose.msra.mxu0 0.0
    %327 = vmatprep.subr.mxu0 0.0
    %328 = vmatpush2.xpose.msra.mxu0 0.0
    %329 = vmatprep.subr.mxu0 0.0
    %330 = vmatpush2.xpose.msra.mxu0 0.0
    %331 = vmatprep.mubr.f32.mxu0 0.0
    %332 = vmatmul.mubr.f32.gmra.mxu0 %v244
    %v333 = vpop.f32.mrf.mxu0
    %v334 = vadd.f32 0.0, %v333
    %v335 = vpop.f32.mrf.mxu0
    %336 = vmatprep.mubr.f32.mxu0 0.0
    %337 = vmatmul.mubr.f32.gmra.mxu0 %v247
    %v338 = vpop.f32.mrf.mxu0
    %v339 = vadd.f32 0.0, %v338
    %v340 = vpop.f32.mrf.mxu0
    %341 = vmatprep.mubr.f32.mxu0 0.0
    %342 = vmatmul.mubr.f32.gmra.mxu0 %v250
    %v343 = vpop.f32.mrf.mxu0
    %v344 = vadd.f32 0.0, %v343
    %v345 = vpop.f32.mrf.mxu0
    %346 = vmatprep.mubr.f32.mxu0 0.0
    %347 = vmatmul.mubr.f32.gmra.mxu0 %v253
    %v348 = vpop.f32.mrf.mxu0
    %v349 = vadd.f32 0.0, %v348
    %v350 = vpop.f32.mrf.mxu0
    %351 = vdwg.mxu0
    %vm352 = vcmp.gt.f32.partialorder %v334, 0.0
    %vm353 = vcmp.gt.f32.partialorder %v339, 0.0
    %vm354 = vcmp.gt.f32.partialorder %v344, 0.0
    %vm355 = vcmp.gt.f32.partialorder %v349, 0.0
    %v356 = vmul.f32 %v334, 0.2
    %v357 = vmul.f32 %v339, 0.2
    %v358 = vmul.f32 %v344, 0.2
    %v359 = vmul.f32 %v349, 0.2
    %v360 = vsel %vm352, %v334, %v356
    %v361 = vsel %vm353, %v339, %v357
    %v362 = vsel %vm354, %v344, %v358
    %v363 = vsel %vm355, %v349, %v359
    %v364 = vadd.f32 %v360, %v25
    %v365 = vadd.f32 %v361, %v26
    %v366 = vadd.f32 %v362, %v27
    %v367 = vadd.f32 %v363, %v28
    %vm368 = vcmask 261120
    %v369 = vsel %vm368, %v364, -inf
    %370 = vmax.xlane.f32.xlu0 %v369
    %v371 = vpop.xlane.xlu0 %370
    %v372 = vsel %vm368, %v365, -inf
    %373 = vmax.xlane.f32.xlu0 %v372
    %v374 = vpop.xlane.xlu0 %373
    %v375 = vsel %vm368, %v366, -inf
    %376 = vmax.xlane.f32.xlu0 %v375
    %v377 = vpop.xlane.xlu0 %376
    %v378 = vsel %vm368, %v367, -inf
    %379 = vmax.xlane.f32.xlu0 %v378
    %v380 = vpop.xlane.xlu0 %379
    %v381 = vsub.f32 %v364, %v371
    %v382 = vsub.f32 %v365, %v374
    %v383 = vsub.f32 %v366, %v377
    %v384 = vsub.f32 %v367, %v380
    %v385 = vmul.f32 %v381, 1.442695
    %v386 = vpow.pop %v385
    %v387 = vmul.f32 %v382, 1.442695
    %v388 = vpow.pop %v387
    %v389 = vmul.f32 %v383, 1.442695
    %v390 = vpow.pop %v389
    %v391 = vmul.f32 %v384, 1.442695
    %v392 = vpow.pop %v391
    %v393 = vsel %vm368, %v386, 0.0
    %394 = vadd.xlane.f32.xlu0 %v393
    %v395 = vpop.xlane.xlu0 %394
    %v396 = vsel %vm368, %v388, 0.0
    %397 = vadd.xlane.f32.xlu0 %v396
    %v398 = vpop.xlane.xlu0 %397
    %v399 = vsel %vm368, %v390, 0.0
    %400 = vadd.xlane.f32.xlu0 %v399
    %v401 = vpop.xlane.xlu0 %400
    %v402 = vsel %vm368, %v392, 0.0
    %403 = vadd.xlane.f32.xlu0 %v402
    %v404 = vpop.xlane.xlu0 %403
    %v406 = vsel %vm368, %v386, 0
    %v409 = vsel %vm368, %v388, 0
    %v412 = vsel %vm368, %v390, 0
    %v415 = vsel %vm368, %v392, 0
    %417 = vmatprep.subr.mxu0 0.0
    %418 = vmatpush1.msra.mxu0 0.0
    %419 = vmatprep.subr.mxu0 0.0
    %420 = vmatpush1.msra.mxu0 0.0
    %421 = vmatprep.subr.mxu0 0.0
    %422 = vmatpush1.msra.mxu0 0.0
    %423 = vmatprep.subr.mxu0 0.0
    %424 = vmatpush1.msra.mxu0 0.0
    %425 = vmatprep.subr.mxu0 0.0
    %426 = vmatpush1.msra.mxu0 0.0
    %427 = vmatprep.subr.mxu0 0.0
    %428 = vmatpush1.msra.mxu0 0.0
    %429 = vmatprep.subr.mxu0 0.0
    %430 = vmatpush1.msra.mxu0 0.0
    %431 = vmatprep.subr.mxu0 0.0
    %432 = vmatpush1.msra.mxu0 0.0
    %433 = vmatprep.subr.mxu0 0.0
    %434 = vmatpush1.msra.mxu0 0.0
    %435 = vmatprep.subr.mxu0 0.0
    %436 = vmatpush1.msra.mxu0 0.0
    %437 = vmatprep.subr.mxu0 0.0
    %438 = vmatpush1.msra.mxu0 0.0
    %439 = vmatprep.subr.mxu0 0.0
    %440 = vmatpush1.msra.mxu0 0.0
    %441 = vmatprep.subr.mxu0 0.0
    %442 = vmatpush1.msra.mxu0 %v104
    %443 = vmatprep.subr.mxu0 0.0
    %444 = vmatpush1.msra.mxu0 %v101
    %445 = vmatprep.subr.mxu0 0.0
    %446 = vmatpush1.msra.mxu0 %v96
    %447 = vmatprep.subr.mxu0 0.0
    %448 = vmatpush1.msra.mxu0 %v93
    %449 = vmatprep.subr.mxu0 0.0
    %450 = vmatpush2.msra.mxu0 0.0
    %451 = vmatprep.subr.mxu0 0.0
    %452 = vmatpush2.msra.mxu0 0.0
    %453 = vmatprep.subr.mxu0 0.0
    %454 = vmatpush2.msra.mxu0 0.0
    %455 = vmatprep.subr.mxu0 0.0
    %456 = vmatpush2.msra.mxu0 0.0
    %457 = vmatprep.subr.mxu0 0.0
    %458 = vmatpush2.msra.mxu0 0.0
    %459 = vmatprep.subr.mxu0 0.0
    %460 = vmatpush2.msra.mxu0 0.0
    %461 = vmatprep.subr.mxu0 0.0
    %462 = vmatpush2.msra.mxu0 0.0
    %463 = vmatprep.subr.mxu0 0.0
    %464 = vmatpush2.msra.mxu0 0.0
    %465 = vmatprep.subr.mxu0 0.0
    %466 = vmatpush2.msra.mxu0 0.0
    %467 = vmatprep.subr.mxu0 0.0
    %468 = vmatpush2.msra.mxu0 0.0
    %469 = vmatprep.subr.mxu0 0.0
    %470 = vmatpush2.msra.mxu0 0.0
    %471 = vmatprep.subr.mxu0 0.0
    %472 = vmatpush2.msra.mxu0 0.0
    %473 = vmatprep.subr.mxu0 0.0
    %474 = vmatpush2.msra.mxu0 0.0
    %475 = vmatprep.subr.mxu0 0.0
    %476 = vmatpush2.msra.mxu0 0.0
    %477 = vmatprep.subr.mxu0 0.0
    %478 = vmatpush2.msra.mxu0 0.0
    %479 = vmatprep.subr.mxu0 0.0
    %480 = vmatpush2.msra.mxu0 0.0
    %481 = vmatprep.mubr.f32.mxu0 0.0
    %482 = vmatmul.mubr.f32.gmra.mxu0 %v406
    %v483 = vpop.f32.mrf.mxu0
    %v484 = vadd.f32 0.0, %v483
    %v485 = vpop.f32.mrf.mxu0
    %486 = vmatprep.mubr.f32.mxu0 0.0
    %487 = vmatmul.mubr.f32.gmra.mxu0 %v409
    %v488 = vpop.f32.mrf.mxu0
    %v489 = vadd.f32 0.0, %v488
    %v490 = vpop.f32.mrf.mxu0
    %491 = vmatprep.mubr.f32.mxu0 0.0
    %492 = vmatmul.mubr.f32.gmra.mxu0 %v412
    %v493 = vpop.f32.mrf.mxu0
    %v494 = vadd.f32 0.0, %v493
    %v495 = vpop.f32.mrf.mxu0
    %496 = vmatprep.mubr.f32.mxu0 0.0
    %497 = vmatmul.mubr.f32.gmra.mxu0 %v415
    %v498 = vpop.f32.mrf.mxu0
    %v499 = vadd.f32 0.0, %v498
    %v500 = vpop.f32.mrf.mxu0
    %501 = vdwg.mxu0
    %v502 = vrcp.pop %v395
    %v503 = vmul.f32 %v484, %v502
    %v504 = vrcp.pop %v398
    %v505 = vmul.f32 %v489, %v504
    %v506 = vrcp.pop %v401
    %v507 = vmul.f32 %v494, %v506
    %v508 = vrcp.pop %v404
    %v509 = vmul.f32 %v499, %v508
    %510 = vrot.lane.b32.xlu0 %v199, 127
    %v511 = vpop.permute.xlu0 %510
    %512 = vrot.lane.b32.xlu0 %v204, 127
    %v513 = vpop.permute.xlu0 %512
    %514 = vrot.lane.b32.xlu0 %v209, 127
    %v515 = vpop.permute.xlu0 %514
    %516 = vrot.lane.b32.xlu0 %v214, 127
    %v517 = vpop.permute.xlu0 %516
    %v522 = vsel %vm217, %v511, 1.0
    %v523 = vsel %vm217, %v513, 1.0
    %v524 = vsel %vm217, %v515, 1.0
    %v525 = vsel %vm217, %v517, 1.0
    %526 = vrot.lane.b32.xlu0 %v199, 125
    %v527 = vpop.permute.xlu0 %526
    %528 = vrot.lane.b32.xlu0 %v204, 125
    %v529 = vpop.permute.xlu0 %528
    %530 = vrot.lane.b32.xlu0 %v209, 125
    %v531 = vpop.permute.xlu0 %530
    %532 = vrot.lane.b32.xlu0 %v214, 125
    %v533 = vpop.permute.xlu0 %532
    %v538 = vsel %vm217, 1.0, %v527
    %v539 = vsel %vm217, 1.0, %v529
    %v540 = vsel %vm217, 1.0, %v531
    %v541 = vsel %vm217, 1.0, %v533
    %v543 = vsel %vm242, %v522, 0
    %v546 = vsel %vm242, %v523, 0
    %v549 = vsel %vm242, %v524, 0
    %v552 = vsel %vm242, %v525, 0
    %v555 = vsel %vm242, %v538, 0
    %v558 = vsel %vm242, %v539, 0
    %v561 = vsel %vm242, %v540, 0
    %v564 = vsel %vm242, %v541, 0
    %566 = vmatprep.subr.mxu0 0.0
    %567 = vmatpush1.xpose.msra.mxu0 0.0
    %568 = vmatprep.subr.mxu0 0.0
    %569 = vmatpush1.xpose.msra.mxu0 0.0
    %570 = vmatprep.subr.mxu0 0.0
    %571 = vmatpush1.xpose.msra.mxu0 0.0
    %572 = vmatprep.subr.mxu0 0.0
    %573 = vmatpush1.xpose.msra.mxu0 0.0
    %574 = vmatprep.subr.mxu0 0.0
    %575 = vmatpush1.xpose.msra.mxu0 0.0
    %576 = vmatprep.subr.mxu0 0.0
    %577 = vmatpush1.xpose.msra.mxu0 0.0
    %578 = vmatprep.subr.mxu0 0.0
    %579 = vmatpush1.xpose.msra.mxu0 0.0
    %580 = vmatprep.subr.mxu0 0.0
    %581 = vmatpush1.xpose.msra.mxu0 0.0
    %582 = vmatprep.subr.mxu0 0.0
    %583 = vmatpush1.xpose.msra.mxu0 0.0
    %584 = vmatprep.subr.mxu0 0.0
    %585 = vmatpush1.xpose.msra.mxu0 0.0
    %586 = vmatprep.subr.mxu0 0.0
    %587 = vmatpush1.xpose.msra.mxu0 0.0
    %588 = vmatprep.subr.mxu0 0.0
    %589 = vmatpush1.xpose.msra.mxu0 0.0
    %590 = vmatprep.subr.mxu0 0.0
    %591 = vmatpush1.xpose.msra.mxu0 %v564
    %592 = vmatprep.subr.mxu0 0.0
    %593 = vmatpush1.xpose.msra.mxu0 %v561
    %594 = vmatprep.subr.mxu0 0.0
    %595 = vmatpush1.xpose.msra.mxu0 %v558
    %596 = vmatprep.subr.mxu0 0.0
    %597 = vmatpush1.xpose.msra.mxu0 %v555
    %598 = vmatprep.subr.mxu0 0.0
    %599 = vmatpush2.xpose.msra.mxu0 0.0
    %600 = vmatprep.subr.mxu0 0.0
    %601 = vmatpush2.xpose.msra.mxu0 0.0
    %602 = vmatprep.subr.mxu0 0.0
    %603 = vmatpush2.xpose.msra.mxu0 0.0
    %604 = vmatprep.subr.mxu0 0.0
    %605 = vmatpush2.xpose.msra.mxu0 0.0
    %606 = vmatprep.subr.mxu0 0.0
    %607 = vmatpush2.xpose.msra.mxu0 0.0
    %608 = vmatprep.subr.mxu0 0.0
    %609 = vmatpush2.xpose.msra.mxu0 0.0
    %610 = vmatprep.subr.mxu0 0.0
    %611 = vmatpush2.xpose.msra.mxu0 0.0
    %612 = vmatprep.subr.mxu0 0.0
    %613 = vmatpush2.xpose.msra.mxu0 0.0
    %614 = vmatprep.subr.mxu0 0.0
    %615 = vmatpush2.xpose.msra.mxu0 0.0
    %616 = vmatprep.subr.mxu0 0.0
    %617 = vmatpush2.xpose.msra.mxu0 0.0
    %618 = vmatprep.subr.mxu0 0.0
    %619 = vmatpush2.xpose.msra.mxu0 0.0
    %620 = vmatprep.subr.mxu0 0.0
    %621 = vmatpush2.xpose.msra.mxu0 0.0
    %622 = vmatprep.subr.mxu0 0.0
    %623 = vmatpush2.xpose.msra.mxu0 0.0
    %624 = vmatprep.subr.mxu0 0.0
    %625 = vmatpush2.xpose.msra.mxu0 0.0
    %626 = vmatprep.subr.mxu0 0.0
    %627 = vmatpush2.xpose.msra.mxu0 0.0
    %628 = vmatprep.subr.mxu0 0.0
    %629 = vmatpush2.xpose.msra.mxu0 0.0
    %630 = vmatprep.mubr.f32.mxu0 0.0
    %631 = vmatmul.mubr.f32.gmra.mxu0 %v543
    %v632 = vpop.f32.mrf.mxu0
    %v633 = vadd.f32 0.0, %v632
    %v634 = vpop.f32.mrf.mxu0
    %635 = vmatprep.mubr.f32.mxu0 0.0
    %636 = vmatmul.mubr.f32.gmra.mxu0 %v546
    %v637 = vpop.f32.mrf.mxu0
    %v638 = vadd.f32 0.0, %v637
    %v639 = vpop.f32.mrf.mxu0
    %640 = vmatprep.mubr.f32.mxu0 0.0
    %641 = vmatmul.mubr.f32.gmra.mxu0 %v549
    %v642 = vpop.f32.mrf.mxu0
    %v643 = vadd.f32 0.0, %v642
    %v644 = vpop.f32.mrf.mxu0
    %645 = vmatprep.mubr.f32.mxu0 0.0
    %646 = vmatmul.mubr.f32.gmra.mxu0 %v552
    %v647 = vpop.f32.mrf.mxu0
    %v648 = vadd.f32 0.0, %v647
    %v649 = vpop.f32.mrf.mxu0
    %650 = vdwg.mxu0
    %vm651 = vcmp.gt.f32.partialorder %v633, 0.0
    %vm652 = vcmp.gt.f32.partialorder %v638, 0.0
    %vm653 = vcmp.gt.f32.partialorder %v643, 0.0
    %vm654 = vcmp.gt.f32.partialorder %v648, 0.0
    %v655 = vmul.f32 %v633, 0.2
    %v656 = vmul.f32 %v638, 0.2
    %v657 = vmul.f32 %v643, 0.2
    %v658 = vmul.f32 %v648, 0.2
    %v659 = vsel %vm651, %v633, %v655
    %v660 = vsel %vm652, %v638, %v656
    %v661 = vsel %vm653, %v643, %v657
    %v662 = vsel %vm654, %v648, %v658
    %v663 = vadd.f32 %v659, %v25
    %v664 = vadd.f32 %v660, %v26
    %v665 = vadd.f32 %v661, %v27
    %v666 = vadd.f32 %v662, %v28
    %v667 = vsel %vm368, %v663, -inf
    %668 = vmax.xlane.f32.xlu0 %v667
    %v669 = vpop.xlane.xlu0 %668
    %v670 = vsel %vm368, %v664, -inf
    %671 = vmax.xlane.f32.xlu0 %v670
    %v672 = vpop.xlane.xlu0 %671
    %v673 = vsel %vm368, %v665, -inf
    %674 = vmax.xlane.f32.xlu0 %v673
    %v675 = vpop.xlane.xlu0 %674
    %v676 = vsel %vm368, %v666, -inf
    %677 = vmax.xlane.f32.xlu0 %v676
    %v678 = vpop.xlane.xlu0 %677
    %v679 = vsub.f32 %v663, %v669
    %v680 = vsub.f32 %v664, %v672
    %v681 = vsub.f32 %v665, %v675
    %v682 = vsub.f32 %v666, %v678
    %v683 = vmul.f32 %v679, 1.442695
    %v684 = vpow.pop %v683
    %v685 = vmul.f32 %v680, 1.442695
    %v686 = vpow.pop %v685
    %v687 = vmul.f32 %v681, 1.442695
    %v688 = vpow.pop %v687
    %v689 = vmul.f32 %v682, 1.442695
    %v690 = vpow.pop %v689
    %v691 = vsel %vm368, %v684, 0.0
    %692 = vadd.xlane.f32.xlu0 %v691
    %v693 = vpop.xlane.xlu0 %692
    %v694 = vsel %vm368, %v686, 0.0
    %695 = vadd.xlane.f32.xlu0 %v694
    %v696 = vpop.xlane.xlu0 %695
    %v697 = vsel %vm368, %v688, 0.0
    %698 = vadd.xlane.f32.xlu0 %v697
    %v699 = vpop.xlane.xlu0 %698
    %v700 = vsel %vm368, %v690, 0.0
    %701 = vadd.xlane.f32.xlu0 %v700
    %v702 = vpop.xlane.xlu0 %701
    %703 = vrot.lane.b32.xlu0 %v93, 96
    %v704 = vpop.permute.xlu0 %703
    %705 = vrot.lane.b32.xlu0 %v96, 96
    %v706 = vpop.permute.xlu0 %705
    %707 = vrot.lane.b32.xlu0 %v101, 96
    %v708 = vpop.permute.xlu0 %707
    %709 = vrot.lane.b32.xlu0 %v104, 96
    %v710 = vpop.permute.xlu0 %709
    %v716 = vsel %vm368, %v684, 0
    %v719 = vsel %vm368, %v686, 0
    %v722 = vsel %vm368, %v688, 0
    %v725 = vsel %vm368, %v690, 0
    %727 = vmatprep.subr.mxu0 0.0
    %728 = vmatpush1.msra.mxu0 0.0
    %729 = vmatprep.subr.mxu0 0.0
    %730 = vmatpush1.msra.mxu0 0.0
    %731 = vmatprep.subr.mxu0 0.0
    %732 = vmatpush1.msra.mxu0 0.0
    %733 = vmatprep.subr.mxu0 0.0
    %734 = vmatpush1.msra.mxu0 0.0
    %735 = vmatprep.subr.mxu0 0.0
    %736 = vmatpush1.msra.mxu0 0.0
    %737 = vmatprep.subr.mxu0 0.0
    %738 = vmatpush1.msra.mxu0 0.0
    %739 = vmatprep.subr.mxu0 0.0
    %740 = vmatpush1.msra.mxu0 0.0
    %741 = vmatprep.subr.mxu0 0.0
    %742 = vmatpush1.msra.mxu0 0.0
    %743 = vmatprep.subr.mxu0 0.0
    %744 = vmatpush1.msra.mxu0 0.0
    %745 = vmatprep.subr.mxu0 0.0
    %746 = vmatpush1.msra.mxu0 0.0
    %747 = vmatprep.subr.mxu0 0.0
    %748 = vmatpush1.msra.mxu0 0.0
    %749 = vmatprep.subr.mxu0 0.0
    %750 = vmatpush1.msra.mxu0 0.0
    %751 = vmatprep.subr.mxu0 0.0
    %752 = vmatpush1.msra.mxu0 %v710
    %753 = vmatprep.subr.mxu0 0.0
    %754 = vmatpush1.msra.mxu0 %v708
    %755 = vmatprep.subr.mxu0 0.0
    %756 = vmatpush1.msra.mxu0 %v706
    %757 = vmatprep.subr.mxu0 0.0
    %758 = vmatpush1.msra.mxu0 %v704
    %759 = vmatprep.subr.mxu0 0.0
    %760 = vmatpush2.msra.mxu0 0.0
    %761 = vmatprep.subr.mxu0 0.0
    %762 = vmatpush2.msra.mxu0 0.0
    %763 = vmatprep.subr.mxu0 0.0
    %764 = vmatpush2.msra.mxu0 0.0
    %765 = vmatprep.subr.mxu0 0.0
    %766 = vmatpush2.msra.mxu0 0.0
    %767 = vmatprep.subr.mxu0 0.0
    %768 = vmatpush2.msra.mxu0 0.0
    %769 = vmatprep.subr.mxu0 0.0
    %770 = vmatpush2.msra.mxu0 0.0
    %771 = vmatprep.subr.mxu0 0.0
    %772 = vmatpush2.msra.mxu0 0.0
    %773 = vmatprep.subr.mxu0 0.0
    %774 = vmatpush2.msra.mxu0 0.0
    %775 = vmatprep.subr.mxu0 0.0
    %776 = vmatpush2.msra.mxu0 0.0
    %777 = vmatprep.subr.mxu0 0.0
    %778 = vmatpush2.msra.mxu0 0.0
    %779 = vmatprep.subr.mxu0 0.0
    %780 = vmatpush2.msra.mxu0 0.0
    %781 = vmatprep.subr.mxu0 0.0
    %782 = vmatpush2.msra.mxu0 0.0
    %783 = vmatprep.subr.mxu0 0.0
    %784 = vmatpush2.msra.mxu0 0.0
    %785 = vmatprep.subr.mxu0 0.0
    %786 = vmatpush2.msra.mxu0 0.0
    %787 = vmatprep.subr.mxu0 0.0
    %788 = vmatpush2.msra.mxu0 0.0
    %789 = vmatprep.subr.mxu0 0.0
    %790 = vmatpush2.msra.mxu0 0.0
    %791 = vmatprep.mubr.f32.mxu0 0.0
    %792 = vmatmul.mubr.f32.gmra.mxu0 %v716
    %v793 = vpop.f32.mrf.mxu0
    %v794 = vadd.f32 0.0, %v793
    %v795 = vpop.f32.mrf.mxu0
    %796 = vmatprep.mubr.f32.mxu0 0.0
    %797 = vmatmul.mubr.f32.gmra.mxu0 %v719
    %v798 = vpop.f32.mrf.mxu0
    %v799 = vadd.f32 0.0, %v798
    %v800 = vpop.f32.mrf.mxu0
    %801 = vmatprep.mubr.f32.mxu0 0.0
    %802 = vmatmul.mubr.f32.gmra.mxu0 %v722
    %v803 = vpop.f32.mrf.mxu0
    %v804 = vadd.f32 0.0, %v803
    %v805 = vpop.f32.mrf.mxu0
    %806 = vmatprep.mubr.f32.mxu0 0.0
    %807 = vmatmul.mubr.f32.gmra.mxu0 %v725
    %v808 = vpop.f32.mrf.mxu0
    %v809 = vadd.f32 0.0, %v808
    %v810 = vpop.f32.mrf.mxu0
    %811 = vdwg.mxu0
    %v812 = vrcp.pop %v693
    %v813 = vmul.f32 %v794, %v812
    %v814 = vrcp.pop %v696
    %v815 = vmul.f32 %v799, %v814
    %v816 = vrcp.pop %v699
    %v817 = vmul.f32 %v804, %v816
    %v818 = vrcp.pop %v702
    %v819 = vmul.f32 %v809, %v818
    %v820 = vsel %vm217, %v227, 1.0
    %v821 = vsel %vm217, %v229, 1.0
    %v822 = vsel %vm217, %v231, 1.0
    %v823 = vsel %vm217, %v233, 1.0
    %824 = vrot.lane.b32.xlu0 %v199, 124
    %v825 = vpop.permute.xlu0 %824
    %826 = vrot.lane.b32.xlu0 %v204, 124
    %v827 = vpop.permute.xlu0 %826
    %828 = vrot.lane.b32.xlu0 %v209, 124
    %v829 = vpop.permute.xlu0 %828
    %830 = vrot.lane.b32.xlu0 %v214, 124
    %v831 = vpop.permute.xlu0 %830
    %v836 = vsel %vm217, 1.0, %v825
    %v837 = vsel %vm217, 1.0, %v827
    %v838 = vsel %vm217, 1.0, %v829
    %v839 = vsel %vm217, 1.0, %v831
    %v841 = vsel %vm242, %v820, 0
    %v844 = vsel %vm242, %v821, 0
    %v847 = vsel %vm242, %v822, 0
    %v850 = vsel %vm242, %v823, 0
    %v853 = vsel %vm242, %v836, 0
    %v856 = vsel %vm242, %v837, 0
    %v859 = vsel %vm242, %v838, 0
    %v862 = vsel %vm242, %v839, 0
    %864 = vmatprep.subr.mxu0 0.0
    %865 = vmatpush1.xpose.msra.mxu0 0.0
    %866 = vmatprep.subr.mxu0 0.0
    %867 = vmatpush1.xpose.msra.mxu0 0.0
    %868 = vmatprep.subr.mxu0 0.0
    %869 = vmatpush1.xpose.msra.mxu0 0.0
    %870 = vmatprep.subr.mxu0 0.0
    %871 = vmatpush1.xpose.msra.mxu0 0.0
    %872 = vmatprep.subr.mxu0 0.0
    %873 = vmatpush1.xpose.msra.mxu0 0.0
    %874 = vmatprep.subr.mxu0 0.0
    %875 = vmatpush1.xpose.msra.mxu0 0.0
    %876 = vmatprep.subr.mxu0 0.0
    %877 = vmatpush1.xpose.msra.mxu0 0.0
    %878 = vmatprep.subr.mxu0 0.0
    %879 = vmatpush1.xpose.msra.mxu0 0.0
    %880 = vmatprep.subr.mxu0 0.0
    %881 = vmatpush1.xpose.msra.mxu0 0.0
    %882 = vmatprep.subr.mxu0 0.0
    %883 = vmatpush1.xpose.msra.mxu0 0.0
    %884 = vmatprep.subr.mxu0 0.0
    %885 = vmatpush1.xpose.msra.mxu0 0.0
    %886 = vmatprep.subr.mxu0 0.0
    %887 = vmatpush1.xpose.msra.mxu0 0.0
    %888 = vmatprep.subr.mxu0 0.0
    %889 = vmatpush1.xpose.msra.mxu0 %v862
    %890 = vmatprep.subr.mxu0 0.0
    %891 = vmatpush1.xpose.msra.mxu0 %v859
    %892 = vmatprep.subr.mxu0 0.0
    %893 = vmatpush1.xpose.msra.mxu0 %v856
    %894 = vmatprep.subr.mxu0 0.0
    %895 = vmatpush1.xpose.msra.mxu0 %v853
    %896 = vmatprep.subr.mxu0 0.0
    %897 = vmatpush2.xpose.msra.mxu0 0.0
    %898 = vmatprep.subr.mxu0 0.0
    %899 = vmatpush2.xpose.msra.mxu0 0.0
    %900 = vmatprep.subr.mxu0 0.0
    %901 = vmatpush2.xpose.msra.mxu0 0.0
    %902 = vmatprep.subr.mxu0 0.0
    %903 = vmatpush2.xpose.msra.mxu0 0.0
    %904 = vmatprep.subr.mxu0 0.0
    %905 = vmatpush2.xpose.msra.mxu0 0.0
    %906 = vmatprep.subr.mxu0 0.0
    %907 = vmatpush2.xpose.msra.mxu0 0.0
    %908 = vmatprep.subr.mxu0 0.0
    %909 = vmatpush2.xpose.msra.mxu0 0.0
    %910 = vmatprep.subr.mxu0 0.0
    %911 = vmatpush2.xpose.msra.mxu0 0.0
    %912 = vmatprep.subr.mxu0 0.0
    %913 = vmatpush2.xpose.msra.mxu0 0.0
    %914 = vmatprep.subr.mxu0 0.0
    %915 = vmatpush2.xpose.msra.mxu0 0.0
    %916 = vmatprep.subr.mxu0 0.0
    %917 = vmatpush2.xpose.msra.mxu0 0.0
    %918 = vmatprep.subr.mxu0 0.0
    %919 = vmatpush2.xpose.msra.mxu0 0.0
    %920 = vmatprep.subr.mxu0 0.0
    %921 = vmatpush2.xpose.msra.mxu0 0.0
    %922 = vmatprep.subr.mxu0 0.0
    %923 = vmatpush2.xpose.msra.mxu0 0.0
    %924 = vmatprep.subr.mxu0 0.0
    %925 = vmatpush2.xpose.msra.mxu0 0.0
    %926 = vmatprep.subr.mxu0 0.0
    %927 = vmatpush2.xpose.msra.mxu0 0.0
    %928 = vmatprep.mubr.f32.mxu0 0.0
    %929 = vmatmul.mubr.f32.gmra.mxu0 %v841
    %v930 = vpop.f32.mrf.mxu0
    %v931 = vadd.f32 0.0, %v930
    %v932 = vpop.f32.mrf.mxu0
    %933 = vmatprep.mubr.f32.mxu0 0.0
    %934 = vmatmul.mubr.f32.gmra.mxu0 %v844
    %v935 = vpop.f32.mrf.mxu0
    %v936 = vadd.f32 0.0, %v935
    %v937 = vpop.f32.mrf.mxu0
    %938 = vmatprep.mubr.f32.mxu0 0.0
    %939 = vmatmul.mubr.f32.gmra.mxu0 %v847
    %v940 = vpop.f32.mrf.mxu0
    %v941 = vadd.f32 0.0, %v940
    %v942 = vpop.f32.mrf.mxu0
    %943 = vmatprep.mubr.f32.mxu0 0.0
    %944 = vmatmul.mubr.f32.gmra.mxu0 %v850
    %v945 = vpop.f32.mrf.mxu0
    %v946 = vadd.f32 0.0, %v945
    %v947 = vpop.f32.mrf.mxu0
    %948 = vdwg.mxu0
    %vm949 = vcmp.gt.f32.partialorder %v931, 0.0
    %vm950 = vcmp.gt.f32.partialorder %v936, 0.0
    %vm951 = vcmp.gt.f32.partialorder %v941, 0.0
    %vm952 = vcmp.gt.f32.partialorder %v946, 0.0
    %v953 = vmul.f32 %v931, 0.2
    %v954 = vmul.f32 %v936, 0.2
    %v955 = vmul.f32 %v941, 0.2
    %v956 = vmul.f32 %v946, 0.2
    %v957 = vsel %vm949, %v931, %v953
    %v958 = vsel %vm950, %v936, %v954
    %v959 = vsel %vm951, %v941, %v955
    %v960 = vsel %vm952, %v946, %v956
    %v961 = vadd.f32 %v957, %v25
    %v962 = vadd.f32 %v958, %v26
    %v963 = vadd.f32 %v959, %v27
    %v964 = vadd.f32 %v960, %v28
    %v965 = vsel %vm368, %v961, -inf
    %966 = vmax.xlane.f32.xlu0 %v965
    %v967 = vpop.xlane.xlu0 %966
    %v968 = vsel %vm368, %v962, -inf
    %969 = vmax.xlane.f32.xlu0 %v968
    %v970 = vpop.xlane.xlu0 %969
    %v971 = vsel %vm368, %v963, -inf
    %972 = vmax.xlane.f32.xlu0 %v971
    %v973 = vpop.xlane.xlu0 %972
    %v974 = vsel %vm368, %v964, -inf
    %975 = vmax.xlane.f32.xlu0 %v974
    %v976 = vpop.xlane.xlu0 %975
    %v977 = vsub.f32 %v961, %v967
    %v978 = vsub.f32 %v962, %v970
    %v979 = vsub.f32 %v963, %v973
    %v980 = vsub.f32 %v964, %v976
    %v981 = vmul.f32 %v977, 1.442695
    %v982 = vpow.pop %v981
    %v983 = vmul.f32 %v978, 1.442695
    %v984 = vpow.pop %v983
    %v985 = vmul.f32 %v979, 1.442695
    %v986 = vpow.pop %v985
    %v987 = vmul.f32 %v980, 1.442695
    %v988 = vpow.pop %v987
    %v989 = vsel %vm368, %v982, 0.0
    %990 = vadd.xlane.f32.xlu0 %v989
    %v991 = vpop.xlane.xlu0 %990
    %v992 = vsel %vm368, %v984, 0.0
    %993 = vadd.xlane.f32.xlu0 %v992
    %v994 = vpop.xlane.xlu0 %993
    %v995 = vsel %vm368, %v986, 0.0
    %996 = vadd.xlane.f32.xlu0 %v995
    %v997 = vpop.xlane.xlu0 %996
    %v998 = vsel %vm368, %v988, 0.0
    %999 = vadd.xlane.f32.xlu0 %v998
    %v1000 = vpop.xlane.xlu0 %999
    %1001 = vrot.lane.b32.xlu0 %v93, 64
    %v1002 = vpop.permute.xlu0 %1001
    %1003 = vrot.lane.b32.xlu0 %v96, 64
    %v1004 = vpop.permute.xlu0 %1003
    %1005 = vrot.lane.b32.xlu0 %v101, 64
    %v1006 = vpop.permute.xlu0 %1005
    %1007 = vrot.lane.b32.xlu0 %v104, 64
    %v1008 = vpop.permute.xlu0 %1007
    %v1014 = vsel %vm368, %v982, 0
    %v1017 = vsel %vm368, %v984, 0
    %v1020 = vsel %vm368, %v986, 0
    %v1023 = vsel %vm368, %v988, 0
    %1025 = vmatprep.subr.mxu0 0.0
    %1026 = vmatpush1.msra.mxu0 0.0
    %1027 = vmatprep.subr.mxu0 0.0
    %1028 = vmatpush1.msra.mxu0 0.0
    %1029 = vmatprep.subr.mxu0 0.0
    %1030 = vmatpush1.msra.mxu0 0.0
    %1031 = vmatprep.subr.mxu0 0.0
    %1032 = vmatpush1.msra.mxu0 0.0
    %1033 = vmatprep.subr.mxu0 0.0
    %1034 = vmatpush1.msra.mxu0 0.0
    %1035 = vmatprep.subr.mxu0 0.0
    %1036 = vmatpush1.msra.mxu0 0.0
    %1037 = vmatprep.subr.mxu0 0.0
    %1038 = vmatpush1.msra.mxu0 0.0
    %1039 = vmatprep.subr.mxu0 0.0
    %1040 = vmatpush1.msra.mxu0 0.0
    %1041 = vmatprep.subr.mxu0 0.0
    %1042 = vmatpush1.msra.mxu0 0.0
    %1043 = vmatprep.subr.mxu0 0.0
    %1044 = vmatpush1.msra.mxu0 0.0
    %1045 = vmatprep.subr.mxu0 0.0
    %1046 = vmatpush1.msra.mxu0 0.0
    %1047 = vmatprep.subr.mxu0 0.0
    %1048 = vmatpush1.msra.mxu0 0.0
    %1049 = vmatprep.subr.mxu0 0.0
    %1050 = vmatpush1.msra.mxu0 %v1008
    %1051 = vmatprep.subr.mxu0 0.0
    %1052 = vmatpush1.msra.mxu0 %v1006
    %1053 = vmatprep.subr.mxu0 0.0
    %1054 = vmatpush1.msra.mxu0 %v1004
    %1055 = vmatprep.subr.mxu0 0.0
    %1056 = vmatpush1.msra.mxu0 %v1002
    %1057 = vmatprep.subr.mxu0 0.0
    %1058 = vmatpush2.msra.mxu0 0.0
    %1059 = vmatprep.subr.mxu0 0.0
    %1060 = vmatpush2.msra.mxu0 0.0
    %1061 = vmatprep.subr.mxu0 0.0
    %1062 = vmatpush2.msra.mxu0 0.0
    %1063 = vmatprep.subr.mxu0 0.0
    %1064 = vmatpush2.msra.mxu0 0.0
    %1065 = vmatprep.subr.mxu0 0.0
    %1066 = vmatpush2.msra.mxu0 0.0
    %1067 = vmatprep.subr.mxu0 0.0
    %1068 = vmatpush2.msra.mxu0 0.0
    %1069 = vmatprep.subr.mxu0 0.0
    %1070 = vmatpush2.msra.mxu0 0.0
    %1071 = vmatprep.subr.mxu0 0.0
    %1072 = vmatpush2.msra.mxu0 0.0
    %1073 = vmatprep.subr.mxu0 0.0
    %1074 = vmatpush2.msra.mxu0 0.0
    %1075 = vmatprep.subr.mxu0 0.0
    %1076 = vmatpush2.msra.mxu0 0.0
    %1077 = vmatprep.subr.mxu0 0.0
    %1078 = vmatpush2.msra.mxu0 0.0
    %1079 = vmatprep.subr.mxu0 0.0
    %1080 = vmatpush2.msra.mxu0 0.0
    %1081 = vmatprep.subr.mxu0 0.0
    %1082 = vmatpush2.msra.mxu0 0.0
    %1083 = vmatprep.subr.mxu0 0.0
    %1084 = vmatpush2.msra.mxu0 0.0
    %1085 = vmatprep.subr.mxu0 0.0
    %1086 = vmatpush2.msra.mxu0 0.0
    %1087 = vmatprep.subr.mxu0 0.0
    %1088 = vmatpush2.msra.mxu0 0.0
    %1089 = vmatprep.mubr.f32.mxu0 0.0
    %1090 = vmatmul.mubr.f32.gmra.mxu0 %v1014
    %v1091 = vpop.f32.mrf.mxu0
    %v1092 = vadd.f32 0.0, %v1091
    %v1093 = vpop.f32.mrf.mxu0
    %1094 = vmatprep.mubr.f32.mxu0 0.0
    %1095 = vmatmul.mubr.f32.gmra.mxu0 %v1017
    %v1096 = vpop.f32.mrf.mxu0
    %v1097 = vadd.f32 0.0, %v1096
    %v1098 = vpop.f32.mrf.mxu0
    %1099 = vmatprep.mubr.f32.mxu0 0.0
    %1100 = vmatmul.mubr.f32.gmra.mxu0 %v1020
    %v1101 = vpop.f32.mrf.mxu0
    %v1102 = vadd.f32 0.0, %v1101
    %v1103 = vpop.f32.mrf.mxu0
    %1104 = vmatprep.mubr.f32.mxu0 0.0
    %1105 = vmatmul.mubr.f32.gmra.mxu0 %v1023
    %v1106 = vpop.f32.mrf.mxu0
    %v1107 = vadd.f32 0.0, %v1106
    %v1108 = vpop.f32.mrf.mxu0
    %1109 = vdwg.mxu0
    %v1110 = vrcp.pop %v991
    %v1111 = vmul.f32 %v1092, %v1110
    %v1112 = vrcp.pop %v994
    %v1113 = vmul.f32 %v1097, %v1112
    %v1114 = vrcp.pop %v997
    %v1115 = vmul.f32 %v1102, %v1114
    %v1116 = vrcp.pop %v1000
    %v1117 = vmul.f32 %v1107, %v1116
    %1122 = vrot.lane.b32.xlu0 %v813, 32
    %v1123 = vpop.permute.xlu0 %1122
    %1124 = vrot.lane.b32.xlu0 %v815, 32
    %v1125 = vpop.permute.xlu0 %1124
    %1126 = vrot.lane.b32.xlu0 %v817, 32
    %v1127 = vpop.permute.xlu0 %1126
    %1128 = vrot.lane.b32.xlu0 %v819, 32
    %v1129 = vpop.permute.xlu0 %1128
    %1138 = vrot.lane.b32.xlu0 %v1111, 64
    %v1139 = vpop.permute.xlu0 %1138
    %1140 = vrot.lane.b32.xlu0 %v1113, 64
    %v1141 = vpop.permute.xlu0 %1140
    %1142 = vrot.lane.b32.xlu0 %v1115, 64
    %v1143 = vpop.permute.xlu0 %1142
    %1144 = vrot.lane.b32.xlu0 %v1117, 64
    %v1145 = vpop.permute.xlu0 %1144
    %v1150 = vsel %vm368, %v503, %v1123
    %v1151 = vsel %vm368, %v505, %v1125
    %v1152 = vsel %vm368, %v507, %v1127
    %v1153 = vsel %vm368, %v509, %v1129
    %vm1154 = vcmask 523264
    %v1155 = vsel %vm1154, %v1150, %v1139
    %v1156 = vsel %vm1154, %v1151, %v1141
    %v1157 = vsel %vm1154, %v1152, %v1143
    %v1158 = vsel %vm1154, %v1153, %v1145
    %vm1159 = vcmp.gt.f32.partialorder %v1155, 0.0
    %vm1160 = vcmp.gt.f32.partialorder %v1156, 0.0
    %vm1161 = vcmp.gt.f32.partialorder %v1157, 0.0
    %vm1162 = vcmp.gt.f32.partialorder %v1158, 0.0
    %v1163 = vmul.f32 %v1155, 1.442695
    %v1164 = vpow.pop %v1163
    %v1165 = vmul.f32 %v1156, 1.442695
    %v1166 = vpow.pop %v1165
    %v1167 = vmul.f32 %v1157, 1.442695
    %v1168 = vpow.pop %v1167
    %v1169 = vmul.f32 %v1158, 1.442695
    %v1170 = vpow.pop %v1169
    %v1171 = vsub.f32 %v1164, 1.0
    %v1172 = vsub.f32 %v1166, 1.0
    %v1173 = vsub.f32 %v1168, 1.0
    %v1174 = vsub.f32 %v1170, 1.0
    %v1175 = vsel %vm1159, %v1155, %v1171
    %v1176 = vsel %vm1160, %v1156, %v1172
    %v1177 = vsel %vm1161, %v1157, %v1173
    %v1178 = vsel %vm1162, %v1158, %v1174
    %v1179 = vpack.c.bf16 %v1176, %v1175
    %v1180 = vpack.c.bf16 %v1178, %v1177
    %v1181 = vld [vmem:[%s4] sm:$0xf]
    %v1182 = vld [vmem:[%s4 + $0x4] sm:$0xf]
    %v1183 = vld [vmem:[%s4 + $0x8] sm:$0xf]
    %v1184 = vld [vmem:[%s4 + $0xc] sm:$0xf]
    %v1185 = vld [vmem:[%s4 + $0x10] sm:$0xf]
    %v1186 = vld [vmem:[%s4 + $0x14] sm:$0xf]
    %v1187 = vld [vmem:[%s4 + $0x18] sm:$0xf]
    %v1188 = vld [vmem:[%s4 + $0x1c] sm:$0xf]
    %v1189 = vld [vmem:[%s4 + $0x20] sm:$0xf]
    %v1190 = vld [vmem:[%s4 + $0x24] sm:$0xf]
    %v1191 = vld [vmem:[%s4 + $0x28] sm:$0xf]
    %v1192 = vld [vmem:[%s4 + $0x2c] sm:$0xf]
    %v1205 = vunpack.c.l.b16 %v1181
    %v1206 = vunpack.c.l.b16 %v1182
    %v1207 = vunpack.c.l.b16 %v1183
    %v1208 = vunpack.c.l.b16 %v1184
    %v1209 = vunpack.c.l.b16 %v1185
    %v1210 = vunpack.c.l.b16 %v1186
    %v1211 = vunpack.c.l.b16 %v1187
    %v1212 = vunpack.c.l.b16 %v1188
    %v1213 = vunpack.c.l.b16 %v1189
    %v1214 = vunpack.c.l.b16 %v1190
    %v1215 = vunpack.c.l.b16 %v1191
    %v1216 = vunpack.c.l.b16 %v1192
    %v1217 = vpack.c.b16 %v1206, %v1205
    %v1218 = vpack.c.b16 %v1208, %v1207
    %v1219 = vpack.c.b16 %v1210, %v1209
    %v1220 = vpack.c.b16 %v1212, %v1211
    %v1221 = vpack.c.b16 %v1214, %v1213
    %v1222 = vpack.c.b16 %v1216, %v1215
    %v1230 = vsel %vm119, %v1179, 0
    %v1233 = vsel %vm119, %v1180, 0
    %1235 = vmatprep.subr.bf16.mxu0 0
    %1236 = vmatpush1.bf16.msra.mxu0 0
    %1237 = vmatprep.subr.bf16.mxu0 0
    %1238 = vmatpush1.bf16.msra.mxu0 0
    %1239 = vmatprep.subr.bf16.mxu0 0
    %1240 = vmatpush1.bf16.msra.mxu0 %v1222
    %1241 = vmatprep.subr.bf16.mxu0 0
    %1242 = vmatpush1.bf16.msra.mxu0 %v1221
    %1243 = vmatprep.subr.bf16.mxu0 0
    %1244 = vmatpush1.bf16.msra.mxu0 %v1220
    %1245 = vmatprep.subr.bf16.mxu0 0
    %1246 = vmatpush1.bf16.msra.mxu0 %v1219
    %1247 = vmatprep.subr.bf16.mxu0 0
    %1248 = vmatpush1.bf16.msra.mxu0 %v1218
    %1249 = vmatprep.subr.bf16.mxu0 0
    %1250 = vmatpush1.bf16.msra.mxu0 %v1217
    %1251 = vmatprep.subr.bf16.mxu0 0
    %1252 = vmatpush2.bf16.msra.mxu0 0
    %1253 = vmatprep.subr.bf16.mxu0 0
    %1254 = vmatpush2.bf16.msra.mxu0 0
    %1255 = vmatprep.subr.bf16.mxu0 0
    %1256 = vmatpush2.bf16.msra.mxu0 0
    %1257 = vmatprep.subr.bf16.mxu0 0
    %1258 = vmatpush2.bf16.msra.mxu0 0
    %1259 = vmatprep.subr.bf16.mxu0 0
    %1260 = vmatpush2.bf16.msra.mxu0 0
    %1261 = vmatprep.subr.bf16.mxu0 0
    %1262 = vmatpush2.bf16.msra.mxu0 0
    %1263 = vmatprep.subr.bf16.mxu0 0
    %1264 = vmatpush2.bf16.msra.mxu0 0
    %1265 = vmatprep.subr.bf16.mxu0 0
    %1266 = vmatpush2.bf16.msra.mxu0 0
    %1267 = vmatprep.mubr.bf16.mxu0 0
    %1268 = vmatmul.mubr.bf16.gmra.mxu0 %v1230
    %v1269 = vpop.f32.mrf.mxu0
    %v1270 = vadd.f32 0.0, %v1269
    %v1271 = vpop.f32.mrf.mxu0
    %v1272 = vpop.f32.mrf.mxu0
    %v1273 = vadd.f32 0.0, %v1272
    %v1274 = vpop.f32.mrf.mxu0
    %1275 = vmatprep.mubr.bf16.mxu0 0
    %1276 = vmatmul.mubr.bf16.gmra.mxu0 %v1233
    %v1277 = vpop.f32.mrf.mxu0
    %v1278 = vadd.f32 0.0, %v1277
    %v1279 = vpop.f32.mrf.mxu0
    %v1280 = vpop.f32.mrf.mxu0
    %v1281 = vadd.f32 0.0, %v1280
    %v1282 = vpop.f32.mrf.mxu0
    %1283 = vdwg.mxu0
    %v1284 = vld [vmem:[%s5] sm:$0xff]
    %v1285 = vld [vmem:[%s5 + $0x8] sm:$0xff]
    %v1286 = vld [vmem:[%s5 + $0x10] sm:$0xff]
    %v1287 = vld [vmem:[%s5 + $0x18] sm:$0xff]
    %v1288 = vld [vmem:[%s5 + $0x20] sm:$0xff]
    %v1289 = vld [vmem:[%s5 + $0x28] sm:$0xff]
    %v1290 = vld [vmem:[%s5 + $0x30] sm:$0xff]
    %v1291 = vld [vmem:[%s5 + $0x38] sm:$0xff]
    %v1292 = vld [vmem:[%s5 + $0x40] sm:$0xff]
    %v1293 = vld [vmem:[%s5 + $0x48] sm:$0xff]
    %v1294 = vld [vmem:[%s5 + $0x50] sm:$0xff]
    %v1295 = vld [vmem:[%s5 + $0x58] sm:$0xff]
    %v1296 = vld [vmem:[%s5 + $0x60] sm:$0xff]
    %v1297 = vld [vmem:[%s5 + $0x68] sm:$0xff]
    %v1298 = vld [vmem:[%s5 + $0x70] sm:$0xff]
    %v1299 = vld [vmem:[%s5 + $0x78] sm:$0xff]
    %1300 = vmatprep.subr.mxu0 0.0
    %1301 = vmatpush1.msra.mxu0 %v1299
    %1302 = vmatprep.subr.mxu0 0.0
    %1303 = vmatpush1.msra.mxu0 %v1298
    %1304 = vmatprep.subr.mxu0 0.0
    %1305 = vmatpush1.msra.mxu0 %v1297
    %1306 = vmatprep.subr.mxu0 0.0
    %1307 = vmatpush1.msra.mxu0 %v1296
    %1308 = vmatprep.subr.mxu0 0.0
    %1309 = vmatpush1.msra.mxu0 %v1295
    %1310 = vmatprep.subr.mxu0 0.0
    %1311 = vmatpush1.msra.mxu0 %v1294
    %1312 = vmatprep.subr.mxu0 0.0
    %1313 = vmatpush1.msra.mxu0 %v1293
    %1314 = vmatprep.subr.mxu0 0.0
    %1315 = vmatpush1.msra.mxu0 %v1292
    %1316 = vmatprep.subr.mxu0 0.0
    %1317 = vmatpush1.msra.mxu0 %v1291
    %1318 = vmatprep.subr.mxu0 0.0
    %1319 = vmatpush1.msra.mxu0 %v1290
    %1320 = vmatprep.subr.mxu0 0.0
    %1321 = vmatpush1.msra.mxu0 %v1289
    %1322 = vmatprep.subr.mxu0 0.0
    %1323 = vmatpush1.msra.mxu0 %v1288
    %1324 = vmatprep.subr.mxu0 0.0
    %1325 = vmatpush1.msra.mxu0 %v1287
    %1326 = vmatprep.subr.mxu0 0.0
    %1327 = vmatpush1.msra.mxu0 %v1286
    %1328 = vmatprep.subr.mxu0 0.0
    %1329 = vmatpush1.msra.mxu0 %v1285
    %1330 = vmatprep.subr.mxu0 0.0
    %1331 = vmatpush1.msra.mxu0 %v1284
    %1332 = vmatprep.subr.mxu0 0.0
    %1333 = vmatpush2.msra.mxu0 0.0
    %1334 = vmatprep.subr.mxu0 0.0
    %1335 = vmatpush2.msra.mxu0 0.0
    %1336 = vmatprep.subr.mxu0 0.0
    %1337 = vmatpush2.msra.mxu0 0.0
    %1338 = vmatprep.subr.mxu0 0.0
    %1339 = vmatpush2.msra.mxu0 0.0
    %1340 = vmatprep.subr.mxu0 0.0
    %1341 = vmatpush2.msra.mxu0 0.0
    %1342 = vmatprep.subr.mxu0 0.0
    %1343 = vmatpush2.msra.mxu0 0.0
    %1344 = vmatprep.subr.mxu0 0.0
    %1345 = vmatpush2.msra.mxu0 0.0
    %1346 = vmatprep.subr.mxu0 0.0
    %1347 = vmatpush2.msra.mxu0 0.0
    %1348 = vmatprep.subr.mxu0 0.0
    %1349 = vmatpush2.msra.mxu0 0.0
    %1350 = vmatprep.subr.mxu0 0.0
    %1351 = vmatpush2.msra.mxu0 0.0
    %1352 = vmatprep.subr.mxu0 0.0
    %1353 = vmatpush2.msra.mxu0 0.0
    %1354 = vmatprep.subr.mxu0 0.0
    %1355 = vmatpush2.msra.mxu0 0.0
    %1356 = vmatprep.subr.mxu0 0.0
    %1357 = vmatpush2.msra.mxu0 0.0
    %1358 = vmatprep.subr.mxu0 0.0
    %1359 = vmatpush2.msra.mxu0 0.0
    %1360 = vmatprep.subr.mxu0 0.0
    %1361 = vmatpush2.msra.mxu0 0.0
    %1362 = vmatprep.subr.mxu0 0.0
    %1363 = vmatpush2.msra.mxu0 0.0
    %1364 = vmatprep.mubr.f32.mxu0 0.0
    %1365 = vmatmul.mubr.f32.gmra.mxu0 %v1270
    %v1366 = vpop.f32.mrf.mxu0
    %v1367 = vadd.f32 0.0, %v1366
    %v1368 = vpop.f32.mrf.mxu0
    %1369 = vmatprep.mubr.f32.mxu0 0.0
    %1370 = vmatmul.mubr.f32.gmra.mxu0 %v1273
    %v1371 = vpop.f32.mrf.mxu0
    %v1372 = vadd.f32 0.0, %v1371
    %v1373 = vpop.f32.mrf.mxu0
    %1374 = vmatprep.mubr.f32.mxu0 0.0
    %1375 = vmatmul.mubr.f32.gmra.mxu0 %v1278
    %v1376 = vpop.f32.mrf.mxu0
    %v1377 = vadd.f32 0.0, %v1376
    %v1378 = vpop.f32.mrf.mxu0
    %1379 = vmatprep.mubr.f32.mxu0 0.0
    %1380 = vmatmul.mubr.f32.gmra.mxu0 %v1281
    %v1381 = vpop.f32.mrf.mxu0
    %v1382 = vadd.f32 0.0, %v1381
    %v1383 = vpop.f32.mrf.mxu0
    %1384 = vdwg.mxu0
    %v1385 = vsel %vm217, %v1367, 1.0
    %v1386 = vsel %vm217, %v1372, 1.0
    %v1387 = vsel %vm217, %v1377, 1.0
    %v1388 = vsel %vm217, %v1382, 1.0
    %v1389 = vsel %vm217, 1.0, %v1367
    %v1390 = vsel %vm217, 1.0, %v1372
    %v1391 = vsel %vm217, 1.0, %v1377
    %v1392 = vsel %vm217, 1.0, %v1382
    %v1394 = vsel %vm242, %v1385, 0
    %v1397 = vsel %vm242, %v1386, 0
    %v1400 = vsel %vm242, %v1387, 0
    %v1403 = vsel %vm242, %v1388, 0
    %v1406 = vsel %vm242, %v1389, 0
    %v1409 = vsel %vm242, %v1390, 0
    %v1412 = vsel %vm242, %v1391, 0
    %v1415 = vsel %vm242, %v1392, 0
    %1417 = vmatprep.subr.mxu0 0.0
    %1418 = vmatpush1.xpose.msra.mxu0 0.0
    %1419 = vmatprep.subr.mxu0 0.0
    %1420 = vmatpush1.xpose.msra.mxu0 0.0
    %1421 = vmatprep.subr.mxu0 0.0
    %1422 = vmatpush1.xpose.msra.mxu0 0.0
    %1423 = vmatprep.subr.mxu0 0.0
    %1424 = vmatpush1.xpose.msra.mxu0 0.0
    %1425 = vmatprep.subr.mxu0 0.0
    %1426 = vmatpush1.xpose.msra.mxu0 0.0
    %1427 = vmatprep.subr.mxu0 0.0
    %1428 = vmatpush1.xpose.msra.mxu0 0.0
    %1429 = vmatprep.subr.mxu0 0.0
    %1430 = vmatpush1.xpose.msra.mxu0 0.0
    %1431 = vmatprep.subr.mxu0 0.0
    %1432 = vmatpush1.xpose.msra.mxu0 0.0
    %1433 = vmatprep.subr.mxu0 0.0
    %1434 = vmatpush1.xpose.msra.mxu0 0.0
    %1435 = vmatprep.subr.mxu0 0.0
    %1436 = vmatpush1.xpose.msra.mxu0 0.0
    %1437 = vmatprep.subr.mxu0 0.0
    %1438 = vmatpush1.xpose.msra.mxu0 0.0
    %1439 = vmatprep.subr.mxu0 0.0
    %1440 = vmatpush1.xpose.msra.mxu0 0.0
    %1441 = vmatprep.subr.mxu0 0.0
    %1442 = vmatpush1.xpose.msra.mxu0 %v1415
    %1443 = vmatprep.subr.mxu0 0.0
    %1444 = vmatpush1.xpose.msra.mxu0 %v1412
    %1445 = vmatprep.subr.mxu0 0.0
    %1446 = vmatpush1.xpose.msra.mxu0 %v1409
    %1447 = vmatprep.subr.mxu0 0.0
    %1448 = vmatpush1.xpose.msra.mxu0 %v1406
    %1449 = vmatprep.subr.mxu0 0.0
    %1450 = vmatpush2.xpose.msra.mxu0 0.0
    %1451 = vmatprep.subr.mxu0 0.0
    %1452 = vmatpush2.xpose.msra.mxu0 0.0
    %1453 = vmatprep.subr.mxu0 0.0
    %1454 = vmatpush2.xpose.msra.mxu0 0.0
    %1455 = vmatprep.subr.mxu0 0.0
    %1456 = vmatpush2.xpose.msra.mxu0 0.0
    %1457 = vmatprep.subr.mxu0 0.0
    %1458 = vmatpush2.xpose.msra.mxu0 0.0
    %1459 = vmatprep.subr.mxu0 0.0
    %1460 = vmatpush2.xpose.msra.mxu0 0.0
    %1461 = vmatprep.subr.mxu0 0.0
    %1462 = vmatpush2.xpose.msra.mxu0 0.0
    %1463 = vmatprep.subr.mxu0 0.0
    %1464 = vmatpush2.xpose.msra.mxu0 0.0
    %1465 = vmatprep.subr.mxu0 0.0
    %1466 = vmatpush2.xpose.msra.mxu0 0.0
    %1467 = vmatprep.subr.mxu0 0.0
    %1468 = vmatpush2.xpose.msra.mxu0 0.0
    %1469 = vmatprep.subr.mxu0 0.0
    %1470 = vmatpush2.xpose.msra.mxu0 0.0
    %1471 = vmatprep.subr.mxu0 0.0
    %1472 = vmatpush2.xpose.msra.mxu0 0.0
    %1473 = vmatprep.subr.mxu0 0.0
    %1474 = vmatpush2.xpose.msra.mxu0 0.0
    %1475 = vmatprep.subr.mxu0 0.0
    %1476 = vmatpush2.xpose.msra.mxu0 0.0
    %1477 = vmatprep.subr.mxu0 0.0
    %1478 = vmatpush2.xpose.msra.mxu0 0.0
    %1479 = vmatprep.subr.mxu0 0.0
    %1480 = vmatpush2.xpose.msra.mxu0 0.0
    %1481 = vmatprep.mubr.f32.mxu0 0.0
    %1482 = vmatmul.mubr.f32.gmra.mxu0 %v1394
    %v1483 = vpop.f32.mrf.mxu0
    %v1484 = vadd.f32 0.0, %v1483
    %v1485 = vpop.f32.mrf.mxu0
    %1486 = vmatprep.mubr.f32.mxu0 0.0
    %1487 = vmatmul.mubr.f32.gmra.mxu0 %v1397
    %v1488 = vpop.f32.mrf.mxu0
    %v1489 = vadd.f32 0.0, %v1488
    %v1490 = vpop.f32.mrf.mxu0
    %1491 = vmatprep.mubr.f32.mxu0 0.0
    %1492 = vmatmul.mubr.f32.gmra.mxu0 %v1400
    %v1493 = vpop.f32.mrf.mxu0
    %v1494 = vadd.f32 0.0, %v1493
    %v1495 = vpop.f32.mrf.mxu0
    %1496 = vmatprep.mubr.f32.mxu0 0.0
    %1497 = vmatmul.mubr.f32.gmra.mxu0 %v1403
    %v1498 = vpop.f32.mrf.mxu0
    %v1499 = vadd.f32 0.0, %v1498
    %v1500 = vpop.f32.mrf.mxu0
    %1501 = vdwg.mxu0
    %vm1502 = vcmp.gt.f32.partialorder %v1484, 0.0
    %vm1503 = vcmp.gt.f32.partialorder %v1489, 0.0
    %vm1504 = vcmp.gt.f32.partialorder %v1494, 0.0
    %vm1505 = vcmp.gt.f32.partialorder %v1499, 0.0
    %v1506 = vmul.f32 %v1484, 0.2
    %v1507 = vmul.f32 %v1489, 0.2
    %v1508 = vmul.f32 %v1494, 0.2
    %v1509 = vmul.f32 %v1499, 0.2
    %v1510 = vsel %vm1502, %v1484, %v1506
    %v1511 = vsel %vm1503, %v1489, %v1507
    %v1512 = vsel %vm1504, %v1494, %v1508
    %v1513 = vsel %vm1505, %v1499, %v1509
    %v1514 = vadd.f32 %v1510, %v25
    %v1515 = vadd.f32 %v1511, %v26
    %v1516 = vadd.f32 %v1512, %v27
    %v1517 = vadd.f32 %v1513, %v28
    %v1518 = vsel %vm368, %v1514, -inf
    %1519 = vmax.xlane.f32.xlu0 %v1518
    %v1520 = vpop.xlane.xlu0 %1519
    %v1521 = vsel %vm368, %v1515, -inf
    %1522 = vmax.xlane.f32.xlu0 %v1521
    %v1523 = vpop.xlane.xlu0 %1522
    %v1524 = vsel %vm368, %v1516, -inf
    %1525 = vmax.xlane.f32.xlu0 %v1524
    %v1526 = vpop.xlane.xlu0 %1525
    %v1527 = vsel %vm368, %v1517, -inf
    %1528 = vmax.xlane.f32.xlu0 %v1527
    %v1529 = vpop.xlane.xlu0 %1528
    %v1530 = vsub.f32 %v1514, %v1520
    %v1531 = vsub.f32 %v1515, %v1523
    %v1532 = vsub.f32 %v1516, %v1526
    %v1533 = vsub.f32 %v1517, %v1529
    %v1534 = vmul.f32 %v1530, 1.442695
    %v1535 = vpow.pop %v1534
    %v1536 = vmul.f32 %v1531, 1.442695
    %v1537 = vpow.pop %v1536
    %v1538 = vmul.f32 %v1532, 1.442695
    %v1539 = vpow.pop %v1538
    %v1540 = vmul.f32 %v1533, 1.442695
    %v1541 = vpow.pop %v1540
    %v1542 = vsel %vm368, %v1535, 0.0
    %1543 = vadd.xlane.f32.xlu0 %v1542
    %v1544 = vpop.xlane.xlu0 %1543
    %v1545 = vsel %vm368, %v1537, 0.0
    %1546 = vadd.xlane.f32.xlu0 %v1545
    %v1547 = vpop.xlane.xlu0 %1546
    %v1548 = vsel %vm368, %v1539, 0.0
    %1549 = vadd.xlane.f32.xlu0 %v1548
    %v1550 = vpop.xlane.xlu0 %1549
    %v1551 = vsel %vm368, %v1541, 0.0
    %1552 = vadd.xlane.f32.xlu0 %v1551
    %v1553 = vpop.xlane.xlu0 %1552
    %v1555 = vsel %vm368, %v1535, 0
    %v1558 = vsel %vm368, %v1537, 0
    %v1561 = vsel %vm368, %v1539, 0
    %v1564 = vsel %vm368, %v1541, 0
    %1566 = vmatprep.subr.mxu0 0.0
    %1567 = vmatpush1.msra.mxu0 0.0
    %1568 = vmatprep.subr.mxu0 0.0
    %1569 = vmatpush1.msra.mxu0 0.0
    %1570 = vmatprep.subr.mxu0 0.0
    %1571 = vmatpush1.msra.mxu0 0.0
    %1572 = vmatprep.subr.mxu0 0.0
    %1573 = vmatpush1.msra.mxu0 0.0
    %1574 = vmatprep.subr.mxu0 0.0
    %1575 = vmatpush1.msra.mxu0 0.0
    %1576 = vmatprep.subr.mxu0 0.0
    %1577 = vmatpush1.msra.mxu0 0.0
    %1578 = vmatprep.subr.mxu0 0.0
    %1579 = vmatpush1.msra.mxu0 0.0
    %1580 = vmatprep.subr.mxu0 0.0
    %1581 = vmatpush1.msra.mxu0 0.0
    %1582 = vmatprep.subr.mxu0 0.0
    %1583 = vmatpush1.msra.mxu0 0.0
    %1584 = vmatprep.subr.mxu0 0.0
    %1585 = vmatpush1.msra.mxu0 0.0
    %1586 = vmatprep.subr.mxu0 0.0
    %1587 = vmatpush1.msra.mxu0 0.0
    %1588 = vmatprep.subr.mxu0 0.0
    %1589 = vmatpush1.msra.mxu0 0.0
    %1590 = vmatprep.subr.mxu0 0.0
    %1591 = vmatpush1.msra.mxu0 %v1281
    %1592 = vmatprep.subr.mxu0 0.0
    %1593 = vmatpush1.msra.mxu0 %v1278
    %1594 = vmatprep.subr.mxu0 0.0
    %1595 = vmatpush1.msra.mxu0 %v1273
    %1596 = vmatprep.subr.mxu0 0.0
    %1597 = vmatpush1.msra.mxu0 %v1270
    %1598 = vmatprep.subr.mxu0 0.0
    %1599 = vmatpush2.msra.mxu0 0.0
    %1600 = vmatprep.subr.mxu0 0.0
    %1601 = vmatpush2.msra.mxu0 0.0
    %1602 = vmatprep.subr.mxu0 0.0
    %1603 = vmatpush2.msra.mxu0 0.0
    %1604 = vmatprep.subr.mxu0 0.0
    %1605 = vmatpush2.msra.mxu0 0.0
    %1606 = vmatprep.subr.mxu0 0.0
    %1607 = vmatpush2.msra.mxu0 0.0
    %1608 = vmatprep.subr.mxu0 0.0
    %1609 = vmatpush2.msra.mxu0 0.0
    %1610 = vmatprep.subr.mxu0 0.0
    %1611 = vmatpush2.msra.mxu0 0.0
    %1612 = vmatprep.subr.mxu0 0.0
    %1613 = vmatpush2.msra.mxu0 0.0
    %1614 = vmatprep.subr.mxu0 0.0
    %1615 = vmatpush2.msra.mxu0 0.0
    %1616 = vmatprep.subr.mxu0 0.0
    %1617 = vmatpush2.msra.mxu0 0.0
    %1618 = vmatprep.subr.mxu0 0.0
    %1619 = vmatpush2.msra.mxu0 0.0
    %1620 = vmatprep.subr.mxu0 0.0
    %1621 = vmatpush2.msra.mxu0 0.0
    %1622 = vmatprep.subr.mxu0 0.0
    %1623 = vmatpush2.msra.mxu0 0.0
    %1624 = vmatprep.subr.mxu0 0.0
    %1625 = vmatpush2.msra.mxu0 0.0
    %1626 = vmatprep.subr.mxu0 0.0
    %1627 = vmatpush2.msra.mxu0 0.0
    %1628 = vmatprep.subr.mxu0 0.0
    %1629 = vmatpush2.msra.mxu0 0.0
    %1630 = vmatprep.mubr.f32.mxu0 0.0
    %1631 = vmatmul.mubr.f32.gmra.mxu0 %v1555
    %v1632 = vpop.f32.mrf.mxu0
    %v1633 = vadd.f32 0.0, %v1632
    %v1634 = vpop.f32.mrf.mxu0
    %1635 = vmatprep.mubr.f32.mxu0 0.0
    %1636 = vmatmul.mubr.f32.gmra.mxu0 %v1558
    %v1637 = vpop.f32.mrf.mxu0
    %v1638 = vadd.f32 0.0, %v1637
    %v1639 = vpop.f32.mrf.mxu0
    %1640 = vmatprep.mubr.f32.mxu0 0.0
    %1641 = vmatmul.mubr.f32.gmra.mxu0 %v1561
    %v1642 = vpop.f32.mrf.mxu0
    %v1643 = vadd.f32 0.0, %v1642
    %v1644 = vpop.f32.mrf.mxu0
    %1645 = vmatprep.mubr.f32.mxu0 0.0
    %1646 = vmatmul.mubr.f32.gmra.mxu0 %v1564
    %v1647 = vpop.f32.mrf.mxu0
    %v1648 = vadd.f32 0.0, %v1647
    %v1649 = vpop.f32.mrf.mxu0
    %1650 = vdwg.mxu0
    %v1651 = vrcp.pop %v1544
    %v1652 = vmul.f32 %v1633, %v1651
    %v1653 = vrcp.pop %v1547
    %v1654 = vmul.f32 %v1638, %v1653
    %v1655 = vrcp.pop %v1550
    %v1656 = vmul.f32 %v1643, %v1655
    %v1657 = vrcp.pop %v1553
    %v1658 = vmul.f32 %v1648, %v1657
    %1659 = vst [vmem:[#allocation2] sm:$0xff] %v1652
    %1660 = vst [vmem:[#allocation2 + $0x8] sm:$0xff] %v1654
    %1661 = vst [vmem:[#allocation2 + $0x10] sm:$0xff] %v1656
    %1662 = vst [vmem:[#allocation2 + $0x18] sm:$0xff] %v1658
    // Predicated region
    $region26: #{tpu_custom_call.1} parent=1 // pred_check
      _
    $region27: #{tpu_custom_call.1} parent=1 // pred_check_branch
      %1664 = sbr.rel (0) target = $region29
    $region28: #{tpu_custom_call.1} parent=1 // pred_region
      %s1666 = ssub.s32 512, 512
      %1667 = vsyncadd [#allocation3], %s1666
      %s1668 = sshll.u32 [#allocation2], 4
      %s1669 = int_to_ptr.vmem [resolvable:$true] %s1668
      %1674 = dma.vmem_to_hbm [thread:$0]  %s1669, 512, %s6, [#allocation3], 128, 128, 8
    $region29: #{tpu_custom_call.1} parent=1 // pred_fallthru
      _
    // Predicated region
    $region30: #{tpu_custom_call.1} parent=1 // pred_check
      _
    $region31: #{tpu_custom_call.1} parent=1 // pred_check_branch
      %1676 = sbr.rel (0) target = $region33
    $region32: #{tpu_custom_call.1} parent=1 // pred_region
      %1677 = dma.done [#allocation3], 512
    $region33: #{tpu_custom_call.1} parent=1 // pred_fallthru
      _
    %1678 = vsyncpa [#allocation3], 1

</llo_original>
